<compile_context>
chip_gen: v6e
topology: v6e:2x2x1
jax: 0.10.0
libtpu: 0.0.40
codegen_flags: <defaults>
</compile_context>

<pallas_src>
import functools

import jax
import jax.numpy as jnp
import numpy as np
from jax.experimental import pallas as pl
from jax.experimental.pallas import tpu as pltpu

LANES = 128       # lane width of every block
PAD = 128         # every weight block is padded to (PAD, LANES)
BIAS_ROWS = 16    # bias block rows (5 used), keeps bf16 sublane packing aligned


def vae3_kernel(io_ref, p_ref, out_ref, part_ref, *, d0, offs):
    """One batch tile of the fused VAE3 forward.

    io_ref:   (2, BT, 128) f32   [0]=x zero-padded to 128 lanes, [1]=noise zero-padded
    p_ref:    (ROWS, 128)  bf16  packed parameter slab (pre-transposed, lane/row padded)
    out_ref:  (BT, 128)    f32   reconstruction (valid lanes 0:D0), lane-dense store
    part_ref: (1, 2, 128)  f32   lane-wise partial sums: row 0 = MSE, row 1 = KLD terms
    """
    x = io_ref[0]        # (BT, 128) f32, lanes >= D0 are zero
    noise = io_ref[1]    # (BT, 128) f32, lanes >= D2 are zero

    # Bias block loaded once (aligned 16-row slice), sliced per layer as a value.
    bias = p_ref[offs["bias"]:offs["bias"] + BIAS_ROWS, :].astype(jnp.float32)

    def lin(a_f32, name, bi):
        w = p_ref[offs[name]:offs[name] + PAD, :]                       # (128,128) bf16
        return (jnp.dot(a_f32.astype(jnp.bfloat16), w,
                        preferred_element_type=jnp.float32)
                + bias[bi:bi + 1, :])

    # ---- encoder: Linear + Tanh (padded lanes stay exactly 0)
    h = jnp.tanh(lin(x, "enc", 0))                                      # (BT,128)
    # ---- mu / gamma heads (padded lanes exactly 0)
    mu = lin(h, "mu", 1)
    gamma = lin(h, "gm", 2)
    # ---- reparameterize (training=True): noise * exp(0.5*gamma) + mu
    sigma = jnp.exp(0.5 * gamma)                                        # padded lanes = 1
    enc = noise * sigma + mu                                            # padded lanes = 0
    # ---- decoder: Linear + Tanh, Linear + Sigmoid
    d1 = jnp.tanh(lin(enc, "dec1", 3))
    recon = jax.nn.sigmoid(lin(d1, "dec2", 4))                          # padded lanes = 0.5
    out_ref[...] = recon                                                # lane-dense (BT,128)

    # ---- loss partials (sublane reduce only; wrapper does the cross-lane/global reduce)
    lane = jax.lax.broadcasted_iota(jnp.int32, recon.shape, 1)
    diff = jnp.where(lane < d0, recon - x, 0.0)                         # mask padded lanes
    part_ref[0, 0:1, :] = jnp.sum(diff * diff, axis=0, keepdims=True)
    # KLD terms: padded lanes contribute exactly 1 + 0 - 0 - 1 = 0 (no mask needed).
    part_ref[0, 1:2, :] = jnp.sum(1.0 + gamma - mu * mu - sigma * sigma,
                                  axis=0, keepdims=True)


def pack_params(params, shapes):
    """One-time host-side packing: pre-transpose weights to (in, out), pad every block to a
    full (128, 128) tile (zeros), append a 16-row bias block, store the slab in bf16."""
    D0, D1, D2 = shapes
    assert max(shapes) <= PAD, "TODO(synk): tile the dots for feature dims > 128"
    names = ("enc", "mu", "gm", "dec1", "dec2")
    offs = {n: i * PAD for i, n in enumerate(names)}
    offs["bias"] = len(names) * PAD
    rows = offs["bias"] + BIAS_ROWS

    slab = np.zeros((rows, LANES), np.float32)   # zeros everywhere => exact zero padding

    def put(name, w, bi, b):
        wt = np.asarray(w, np.float32).T                       # (in_features, out_features)
        r0 = offs[name]
        slab[r0:r0 + wt.shape[0], :wt.shape[1]] = wt
        bv = np.asarray(b, np.float32).reshape(-1)
        slab[offs["bias"] + bi, :bv.shape[0]] = bv

    put("enc", params["w_enc"], 0, params["b_enc"])            # (D0, D1)
    put("mu", params["w_mu"], 1, params["b_mu"])               # (D1, D2)
    put("gm", params["w_gm"], 2, params["b_gm"])               # (D1, D2)
    put("dec1", params["w_dec1"], 3, params["b_dec1"])         # (D2, D1)
    put("dec2", params["w_dec2"], 4, params["b_dec2"])         # (D1, D0)

    layout = {"dims": (D0, D1, D2), "offs": offs, "rows": rows}
    return jnp.asarray(slab, dtype=jnp.bfloat16), layout


def vae3_forward(x, noise, param_slab, layout, *, block_b=128):
    """Fused VAE3 forward. Returns (loss_scalar, flat_reconstruction)."""
    B, d0 = x.shape
    d2 = layout["dims"][2]
    rows = layout["rows"]
    assert B % block_b == 0, "TODO(synk): pad/mask a ragged final batch tile"
    g = B // block_b

    # Host-side layout plumbing: zero-pad to 128 lanes and fuse x + noise into one slab.
    x_pad = jnp.zeros((B, LANES), jnp.float32).at[:, :d0].set(x)
    n_pad = jnp.zeros((B, LANES), jnp.float32).at[:, :d2].set(noise)
    io = jnp.stack([x_pad, n_pad], axis=0)                     # (2, B, 128)

    kernel = functools.partial(vae3_kernel, d0=d0, offs=layout["offs"])
    recon_pad, partials = pl.pallas_call(
        kernel,
        grid=(g,),
        out_shape=(
            jax.ShapeDtypeStruct((B, LANES), jnp.float32),
            jax.ShapeDtypeStruct((g, 2, LANES), jnp.float32),
        ),
        in_specs=[
            pl.BlockSpec((2, block_b, LANES), lambda i: (0, i, 0)),
            pl.BlockSpec((rows, LANES), lambda i: (0, 0)),     # constant -> stays resident
        ],
        out_specs=(
            pl.BlockSpec((block_b, LANES), lambda i: (i, 0)),
            pl.BlockSpec((1, 2, LANES), lambda i: (i, 0, 0)),
        ),
        compiler_params=pltpu.CompilerParams(
            dimension_semantics=("parallel",)),
    )(io, param_slab)

    mse = jnp.sum(partials[:, 0, :]) / (B * d0)                # F.mse_loss 'mean'
    kld = -0.5 * jnp.sum(partials[:, 1, :]) / d0               # /= batch_size(=1) * D0
    return mse + kld, recon_pad[:, :d0].reshape(-1)


def make_params(key, shapes):
    """Deterministic parameter init (PyTorch Linear-style uniform +-1/sqrt(fan_in)),
    kept in PyTorch (out_features, in_features) convention; packing transposes once."""
    D0, D1, D2 = shapes
    ks = jax.random.split(key, 10)

    def lin(kw, kb, out_f, in_f):
        bound = 1.0 / np.sqrt(in_f)
        w = jax.random.uniform(kw, (out_f, in_f), jnp.float32, -bound, bound)
        b = jax.random.uniform(kb, (1, out_f), jnp.float32, -bound, bound)
        return w, b

    w_enc, b_enc = lin(ks[0], ks[1], D1, D0)
    w_mu, b_mu = lin(ks[2], ks[3], D2, D1)
    w_gm, b_gm = lin(ks[4], ks[5], D2, D1)
    w_dec1, b_dec1 = lin(ks[6], ks[7], D1, D2)
    w_dec2, b_dec2 = lin(ks[8], ks[9], D0, D1)
    return dict(
        w_enc=w_enc, b_enc=b_enc,
        w_mu=w_mu, b_mu=b_mu,
        w_gm=w_gm, b_gm=b_gm,
        w_dec1=w_dec1, b_dec1=b_dec1,
        w_dec2=w_dec2, b_dec2=b_dec2,
    )


def vae3_reference(x, params, noise):
    """Pure-JAX reference (unpacked params).  Matmul operands in bf16 with f32 accumulation
    to match the kernel's precision policy; all elementwise / loss math in f32."""
    bf16 = jnp.bfloat16

    def lin(a, w, b):      # w: (out,in) torch convention, b: (1,out)
        y = jnp.dot(a.astype(bf16), jnp.asarray(w).T.astype(bf16),
                    preferred_element_type=jnp.float32)
        return y + jnp.asarray(b).astype(bf16).astype(jnp.float32)

    h = jnp.tanh(lin(x, params["w_enc"], params["b_enc"]))
    mu = lin(h, params["w_mu"], params["b_mu"])
    gamma = lin(h, params["w_gm"], params["b_gm"])
    enc = noise * jnp.exp(0.5 * gamma) + mu
    d1 = jnp.tanh(lin(enc, params["w_dec1"], params["b_dec1"]))
    recon = jax.nn.sigmoid(lin(d1, params["w_dec2"], params["b_dec2"]))
    mse = jnp.mean((recon - x) ** 2)
    kld = -0.5 * jnp.sum(1.0 + gamma - mu**2 - jnp.exp(gamma)) / x.shape[1]
    return mse + kld, recon.reshape(-1)


if __name__ == "__main__":
    # shapes = (input_dim D0, hidden_dim D1, latent_dim D2)
    shapes = (64, 32, 16)
    init_mean, init_std = 0.0, 1.0
    B, BT = 512, 128          # batched per perf review; grid = (B // BT,)

    key = jax.random.PRNGKey(0)
    k_x, k_p, k_n = jax.random.split(key, 3)

    x = jax.random.uniform(k_x, (B, shapes[0]), jnp.float32)    # inputs in [0,1)
    params = make_params(k_p, shapes)
    # TODO(synk): noise could be drawn in-kernel with pltpu.prng_random_bits; kept as an
    # input here to stay deterministic and checkable against the reference.
    noise = init_mean + init_std * jax.random.normal(k_n, (B, shapes[2]), jnp.float32)

    param_slab, layout = pack_params(params, shapes)

    loss, flat_out = vae3_forward(x, noise, param_slab, layout, block_b=BT)
    jax.block_until_ready((loss, flat_out))

    ref_loss, ref_out = vae3_reference(x, params, noise)
    np.testing.assert_allclose(np.asarray(loss), np.asarray(ref_loss), rtol=2e-3, atol=2e-3)
    np.testing.assert_allclose(np.asarray(flat_out), np.asarray(ref_out), rtol=2e-3, atol=2e-3)

    assert flat_out.shape == (B * shapes[0],)
    print("KERNEL_OK")
</pallas_src>

<mosaic_0001>
module attributes {stable_mosaic.version = 11 : i64} {
  func.func @vae3_kernel(%arg0: i32, %arg1: memref<2x128x128xf32, #tpu.memory_space<vmem>>, %arg2: memref<656x128xbf16, #tpu.memory_space<vmem>>, %arg3: memref<128x128xf32, #tpu.memory_space<vmem>>, %arg4: memref<1x2x128xf32, #tpu.memory_space<vmem>>) attributes {dimension_semantics = [#tpu.dimension_semantics<parallel>], iteration_bounds = array<i64: 4>, scalar_prefetch = 0 : i64, scratch_operands = 0 : i64, tpu.core_type = #tpu.core_type<tc>, window_params = [{transform_indices = @transform_0, window_bounds = array<i64: 2, 128, 128>}, {pipeline_mode = #tpu.pipeline_mode<synchronous>, transform_indices = @transform_1, window_bounds = array<i64: 656, 128>}, {transform_indices = @transform_2, window_bounds = array<i64: 128, 128>}, {transform_indices = @transform_3, window_bounds = array<i64: 1, 2, 128>}]} {
    %c0 = arith.constant 0 : index
    %c0_0 = arith.constant 0 : index
    %c0_1 = arith.constant 0 : index
    %0 = vector.load %arg1[%c0, %c0_0, %c0_1] : memref<2x128x128xf32, #tpu.memory_space<vmem>>, vector<1x128x128xf32>
    %1 = vector.shape_cast %0 : vector<1x128x128xf32> to vector<128x128xf32>
    %c1 = arith.constant 1 : index
    %c0_2 = arith.constant 0 : index
    %c0_3 = arith.constant 0 : index
    %2 = vector.load %arg1[%c1, %c0_2, %c0_3] : memref<2x128x128xf32, #tpu.memory_space<vmem>>, vector<1x128x128xf32>
    %3 = vector.shape_cast %2 : vector<1x128x128xf32> to vector<128x128xf32>
    %c640 = arith.constant 640 : index
    %c0_4 = arith.constant 0 : index
    %4 = vector.load %arg2[%c640, %c0_4] : memref<656x128xbf16, #tpu.memory_space<vmem>>, vector<16x128xbf16>
    %5 = arith.extf %4 : vector<16x128xbf16> to vector<16x128xf32>
    %c0_5 = arith.constant 0 : index
    %c0_6 = arith.constant 0 : index
    %6 = vector.load %arg2[%c0_5, %c0_6] : memref<656x128xbf16, #tpu.memory_space<vmem>>, vector<128x128xbf16>
    %7 = arith.truncf %1 : vector<128x128xf32> to vector<128x128xbf16>
    %cst = arith.constant dense<0.000000e+00> : vector<128x128xf32>
    %8 = tpu.matmul %7, %6, %cst {dimension_numbers = #tpu.dot_dimension_numbers<[1], [0], [0], [1], [0, 0, 1, 1], [], []>} : vector<128x128xbf16>, vector<128x128xbf16>, vector<128x128xf32> -> vector<128x128xf32>
    %9 = vector.extract_strided_slice %5 {offsets = [0, 0], sizes = [1, 128], strides = [1, 1]} : vector<16x128xf32> to vector<1x128xf32>
    %10 = vector.broadcast %9 : vector<1x128xf32> to vector<128x128xf32>
    %11 = arith.addf %8, %10 : vector<128x128xf32>
    %12 = math.tanh %11 : vector<128x128xf32>
    %c128 = arith.constant 128 : index
    %c0_7 = arith.constant 0 : index
    %13 = vector.load %arg2[%c128, %c0_7] : memref<656x128xbf16, #tpu.memory_space<vmem>>, vector<128x128xbf16>
    %14 = arith.truncf %12 : vector<128x128xf32> to vector<128x128xbf16>
    %cst_8 = arith.constant dense<0.000000e+00> : vector<128x128xf32>
    %15 = tpu.matmul %14, %13, %cst_8 {dimension_numbers = #tpu.dot_dimension_numbers<[1], [0], [0], [1], [0, 0, 1, 1], [], []>} : vector<128x128xbf16>, vector<128x128xbf16>, vector<128x128xf32> -> vector<128x128xf32>
    %16 = vector.extract_strided_slice %5 {offsets = [1, 0], sizes = [1, 128], strides = [1, 1]} : vector<16x128xf32> to vector<1x128xf32>
    %17 = vector.broadcast %16 : vector<1x128xf32> to vector<128x128xf32>
    %18 = arith.addf %15, %17 : vector<128x128xf32>
    %c256 = arith.constant 256 : index
    %c0_9 = arith.constant 0 : index
    %19 = vector.load %arg2[%c256, %c0_9] : memref<656x128xbf16, #tpu.memory_space<vmem>>, vector<128x128xbf16>
    %20 = arith.truncf %12 : vector<128x128xf32> to vector<128x128xbf16>
    %cst_10 = arith.constant dense<0.000000e+00> : vector<128x128xf32>
    %21 = tpu.matmul %20, %19, %cst_10 {dimension_numbers = #tpu.dot_dimension_numbers<[1], [0], [0], [1], [0, 0, 1, 1], [], []>} : vector<128x128xbf16>, vector<128x128xbf16>, vector<128x128xf32> -> vector<128x128xf32>
    %22 = vector.extract_strided_slice %5 {offsets = [2, 0], sizes = [1, 128], strides = [1, 1]} : vector<16x128xf32> to vector<1x128xf32>
    %23 = vector.broadcast %22 : vector<1x128xf32> to vector<128x128xf32>
    %24 = arith.addf %21, %23 : vector<128x128xf32>
    %cst_11 = arith.constant 5.000000e-01 : f32
    %25 = vector.broadcast %cst_11 : f32 to vector<128x128xf32>
    %26 = arith.mulf %25, %24 : vector<128x128xf32>
    %27 = math.exp %26 : vector<128x128xf32>
    %28 = arith.mulf %3, %27 : vector<128x128xf32>
    %29 = arith.addf %28, %18 : vector<128x128xf32>
    %c384 = arith.constant 384 : index
    %c0_12 = arith.constant 0 : index
    %30 = vector.load %arg2[%c384, %c0_12] : memref<656x128xbf16, #tpu.memory_space<vmem>>, vector<128x128xbf16>
    %31 = arith.truncf %29 : vector<128x128xf32> to vector<128x128xbf16>
    %cst_13 = arith.constant dense<0.000000e+00> : vector<128x128xf32>
    %32 = tpu.matmul %31, %30, %cst_13 {dimension_numbers = #tpu.dot_dimension_numbers<[1], [0], [0], [1], [0, 0, 1, 1], [], []>} : vector<128x128xbf16>, vector<128x128xbf16>, vector<128x128xf32> -> vector<128x128xf32>
    %33 = vector.extract_strided_slice %5 {offsets = [3, 0], sizes = [1, 128], strides = [1, 1]} : vector<16x128xf32> to vector<1x128xf32>
    %34 = vector.broadcast %33 : vector<1x128xf32> to vector<128x128xf32>
    %35 = arith.addf %32, %34 : vector<128x128xf32>
    %36 = math.tanh %35 : vector<128x128xf32>
    %c512 = arith.constant 512 : index
    %c0_14 = arith.constant 0 : index
    %37 = vector.load %arg2[%c512, %c0_14] : memref<656x128xbf16, #tpu.memory_space<vmem>>, vector<128x128xbf16>
    %38 = arith.truncf %36 : vector<128x128xf32> to vector<128x128xbf16>
    %cst_15 = arith.constant dense<0.000000e+00> : vector<128x128xf32>
    %39 = tpu.matmul %38, %37, %cst_15 {dimension_numbers = #tpu.dot_dimension_numbers<[1], [0], [0], [1], [0, 0, 1, 1], [], []>} : vector<128x128xbf16>, vector<128x128xbf16>, vector<128x128xf32> -> vector<128x128xf32>
    %40 = vector.extract_strided_slice %5 {offsets = [4, 0], sizes = [1, 128], strides = [1, 1]} : vector<16x128xf32> to vector<1x128xf32>
    %41 = vector.broadcast %40 : vector<1x128xf32> to vector<128x128xf32>
    %42 = arith.addf %39, %41 : vector<128x128xf32>
    %43 = arith.negf %42 : vector<128x128xf32>
    %44 = math.exp %43 : vector<128x128xf32>
    %cst_16 = arith.constant 1.000000e+00 : f32
    %45 = vector.broadcast %cst_16 : f32 to vector<128x128xf32>
    %46 = arith.addf %45, %44 : vector<128x128xf32>
    %47 = arith.divf %45, %46 : vector<128x128xf32>
    %c0_17 = arith.constant 0 : index
    %c0_18 = arith.constant 0 : index
    %48 = vector.load %arg3[%c0_17, %c0_18] : memref<128x128xf32, #tpu.memory_space<vmem>>, vector<128x128xf32>
    tpu.vector_store %arg3[%c0_17, %c0_18], %47 {strides = array<i32>} : memref<128x128xf32, #tpu.memory_space<vmem>>, vector<128x128xf32>,
    %49 = tpu.iota {dimensions = array<i32: 1>} : vector<128x128xi32>
    %c64_i32 = arith.constant 64 : i32
    %50 = vector.broadcast %c64_i32 : i32 to vector<128x128xi32>
    %51 = arith.cmpi slt, %49, %50 : vector<128x128xi32>
    %52 = arith.subf %47, %1 : vector<128x128xf32>
    %cst_19 = arith.constant 0.000000e+00 : f32
    %53 = vector.broadcast %cst_19 : f32 to vector<128x128xf32>
    %54 = arith.select %51, %52, %53 : vector<128x128xi1>, vector<128x128xf32>
    %55 = arith.mulf %54, %54 : vector<128x128xf32>
    %cst_20 = arith.constant dense<0.000000e+00> : vector<128xf32>
    %56 = vector.multi_reduction <add>, %55, %cst_20 [0] : vector<128x128xf32> to vector<128xf32>
    %57 = vector.shape_cast %56 : vector<128xf32> to vector<1x128xf32>
    %c0_21 = arith.constant 0 : index
    %c0_22 = arith.constant 0 : index
    %c0_23 = arith.constant 0 : index
    %58 = vector.load %arg4[%c0_21, %c0_22, %c0_23] : memref<1x2x128xf32, #tpu.memory_space<vmem>>, vector<1x1x128xf32>
    %59 = vector.shape_cast %58 : vector<1x1x128xf32> to vector<1x128xf32>
    %60 = vector.shape_cast %57 : vector<1x128xf32> to vector<1x1x128xf32>
    tpu.vector_store %arg4[%c0_21, %c0_22, %c0_23], %60 {strides = array<i32>} : memref<1x2x128xf32, #tpu.memory_space<vmem>>, vector<1x1x128xf32>,
    %cst_24 = arith.constant 1.000000e+00 : f32
    %61 = vector.broadcast %cst_24 : f32 to vector<128x128xf32>
    %62 = arith.addf %61, %24 : vector<128x128xf32>
    %63 = arith.mulf %18, %18 : vector<128x128xf32>
    %64 = arith.subf %62, %63 : vector<128x128xf32>
    %65 = arith.mulf %27, %27 : vector<128x128xf32>
    %66 = arith.subf %64, %65 : vector<128x128xf32>
    %cst_25 = arith.constant dense<0.000000e+00> : vector<128xf32>
    %67 = vector.multi_reduction <add>, %66, %cst_25 [0] : vector<128x128xf32> to vector<128xf32>
    %68 = vector.shape_cast %67 : vector<128xf32> to vector<1x128xf32>
    %c0_26 = arith.constant 0 : index
    %c1_27 = arith.constant 1 : index
    %c0_28 = arith.constant 0 : index
    %69 = vector.load %arg4[%c0_26, %c1_27, %c0_28] : memref<1x2x128xf32, #tpu.memory_space<vmem>>, vector<1x1x128xf32>
    %70 = vector.shape_cast %69 : vector<1x1x128xf32> to vector<1x128xf32>
    %71 = vector.shape_cast %68 : vector<1x128xf32> to vector<1x1x128xf32>
    tpu.vector_store %arg4[%c0_26, %c1_27, %c0_28], %71 {strides = array<i32>} : memref<1x2x128xf32, #tpu.memory_space<vmem>>, vector<1x1x128xf32>,
    return
  }
  func.func @transform_0(%arg0: i32) -> (i32, i32, i32) {
    %c0_i32 = arith.constant 0 : i32
    %c0_i32_0 = arith.constant 0 : i32
    %c0_i32_1 = arith.constant 0 : i32
    return %c0_i32, %arg0, %c0_i32_0 : i32, i32, i32
  }
  func.func @transform_1(%arg0: i32) -> (i32, i32) {
    %c0_i32 = arith.constant 0 : i32
    %c0_i32_0 = arith.constant 0 : i32
    %c0_i32_1 = arith.constant 0 : i32
    return %c0_i32, %c0_i32_0 : i32, i32
  }
  func.func @transform_2(%arg0: i32) -> (i32, i32) {
    %c0_i32 = arith.constant 0 : i32
    %c0_i32_0 = arith.constant 0 : i32
    return %arg0, %c0_i32 : i32, i32
  }
  func.func @transform_3(%arg0: i32) -> (i32, i32, i32) {
    %c0_i32 = arith.constant 0 : i32
    %c0_i32_0 = arith.constant 0 : i32
    %c0_i32_1 = arith.constant 0 : i32
    return %arg0, %c0_i32, %c0_i32_0 : i32, i32, i32
  }
}

</mosaic_0001>

<llo_original>
// kernel: tpu_custom_call.1
$region0: #{tpu_custom_call.1}
  #allocation0 [shape = 'u32[]', space=smem, size = 0x4, offset = 0x4, fixed_abs, tag = 'smem constant byte address 0x4 - core index']
  #allocation1 [shape = 'u32[144,128]{1,0:T(1,128)}', space=vmem, size = 0x12000, scoped, tag = 'internal scratch']
  #allocation10 [shape = 's32[]', space=sflag, size = 0x4, offset = 0, fixed_abs, tag = 'sflag constant byte address 0x0 - dummy sync flag']
  %s0 = inlined_call_operand.hbm [shape: f32[2,512,128], index: 0, kind: input, shape index: {}]
  %s1 = inlined_call_operand.hbm [shape: bf16[656,128], index: 1, kind: input, shape index: {}]
  %s2 = inlined_call_operand.hbm [shape: f32[512,128], index: 2, kind: output, shape index: {0}]
  %s3 = inlined_call_operand.hbm [shape: f32[4,2,128], index: 3, kind: output, shape index: {1}]
  %4 = xla_tuple %s2, %s3
  %s5 = sld [smem:[#allocation0]]
  $region57: #{tpu_custom_call.1} parent=0
    _
  %s7 = ssub.s32 1, %s5
  %s8 = scalar_select 0, %s7, %s5
  $region1: #{tpu_custom_call.1} parent=0
    #allocation2 [shape = 'u8[262144]{0}', space=vmem, size = 0x40000, scoped, tag = 'input window, operand 0']
    #allocation3 [shape = 's32[2]{0}', space=sflag, size = 0x8, scoped, tag = 'scoped memory for tpu_custom_call.1']
    #allocation4 [shape = 's32[2]{0}', space=sflag, size = 0x8, scoped, tag = 'scoped memory for tpu_custom_call.1']
    #allocation5 [shape = 'u8[167936]{0}', space=vmem, size = 0x29000, scoped, tag = 'input window, operand 1, single buffered']
    #allocation6 [shape = 's32[1]{0}', space=sflag, size = 0x4, scoped, tag = 'scoped memory for tpu_custom_call.1']
    #allocation7 [shape = 'u8[131072]{0}', space=vmem, size = 0x20000, scoped, tag = 'output window, operand 0']
    #allocation8 [shape = 'u8[2048]{0}', space=vmem, size = 0x800, scoped, tag = 'output window, operand 1']
    #allocation9 [shape = 's32[2]{0}', space=sflag, size = 0x8, scoped, tag = 'scoped memory for tpu_custom_call.1']
    %9 = vsyncpa [#allocation3], 0
    %s10 = scalar_lea.sflag [#allocation3], 1
    %11 = vsyncpa %s10, 0
    %12 = vsyncpa [#allocation6], 0
    %13 = vsyncpa [#allocation4], 0
    %s14 = scalar_lea.sflag [#allocation4], 1
    %15 = vsyncpa %s14, 0
    %16 = vsyncpa [#allocation9], 0
    %s17 = scalar_lea.sflag [#allocation9], 1
    %18 = vsyncpa %s17, 0
    loop: start=0, step=1, limit=6
    $region2: #{tpu_custom_call.1} parent=1 // loop_pre_header
      _
    $region3: #{tpu_custom_call.1} parent=1 // loop_header
      %s20 = sphi 0, %s24
      %p21 = scmp.ge.s32.totalorder %s20, 6
      %s30 = sphi 0, %s32
      %s33 = sphi 0, %s30
      %s34 = sphi 0, %s33
      %s50 = sphi 0, %s34
      %s54 = sphi 0, %s54
      %s56 = sphi 0, %s54
      %s57 = sphi 0, %s56
      %s71 = sphi 0, %s57
      %s77 = sphi 0, %s79
      %s80 = sphi 0, %s77
      %s81 = sphi 0, %s80
      %s97 = sphi 0, %s81
      %s103 = sphi 0, %s105
      %s106 = sphi 0, %s103
      %s107 = sphi 0, %s106
      %s123 = sphi 0, %s107
    $region4: #{tpu_custom_call.1} parent=1 // loop_header_branch
      %23 = sbr.rel (%p21) target = $region8
    $region5: #{tpu_custom_call.1} parent=1 // loop_body
      %s25 = ssub.s32 %s20, 1
      %s26 = ssub.s32 %s20, 2
      %s27 = sadd.s32 %s20, 1
      %s28 = ssub.s32 %s20, %s27
      %p29 = scmp.eq.s32.totalorder %s28, 0
      %s31 = sadd.s32 %s30, 1
      %s32 = scalar_select %p29, %s30, %s31
      %p35 = pneg %p29
      %p36 = scmp.eq.s32.totalorder %s20, 3
      %p37 = por %p35, %p36
      %p38 = scmp.ne.s32.totalorder %s30, %s33
      %p39 = scmp.eq.s32.totalorder %s20, 0
      %p40 = por %p38, %p39
      %p41 = scmp.ne.s32.totalorder %s30, %s33
      %p42 = scmp.eq.s32.totalorder %s25, 3
      %p43 = por %p41, %p42
      %p44 = scmp.ne.s32.totalorder %s33, %s34
      %p45 = scmp.eq.s32.totalorder %s25, 0
      %p46 = por %p44, %p45
      %p47 = scmp.ne.s32.totalorder %s33, %s34
      %p48 = scmp.eq.s32.totalorder %s26, 3
      %p49 = por %p47, %p48
      %p51 = scmp.ne.s32.totalorder %s34, %s50
      %p52 = scmp.eq.s32.totalorder %s26, 0
      %p53 = por %p51, %p52
      %s55 = sadd.s32 %s54, 1
      %p58 = scmp.eq.s32.totalorder %s20, 3
      %p59 = scmp.ne.s32.totalorder %s54, %s56
      %p60 = scmp.eq.s32.totalorder %s20, 0
      %p61 = por %p59, %p60
      %p62 = scmp.ne.s32.totalorder %s54, %s56
      %p63 = scmp.eq.s32.totalorder %s25, 3
      %p64 = por %p62, %p63
      %p65 = scmp.ne.s32.totalorder %s56, %s57
      %p66 = scmp.eq.s32.totalorder %s25, 0
      %p67 = por %p65, %p66
      %p68 = scmp.ne.s32.totalorder %s56, %s57
      %p69 = scmp.eq.s32.totalorder %s26, 3
      %p70 = por %p68, %p69
      %p72 = scmp.ne.s32.totalorder %s57, %s71
      %p73 = scmp.eq.s32.totalorder %s26, 0
      %p74 = por %p72, %p73
      %s75 = ssub.s32 %s20, %s27
      %p76 = scmp.eq.s32.totalorder %s75, 0
      %s78 = sadd.s32 %s77, 1
      %s79 = scalar_select %p76, %s77, %s78
      %p82 = pneg %p76
      %p83 = scmp.eq.s32.totalorder %s20, 3
      %p84 = por %p82, %p83
      %p85 = scmp.ne.s32.totalorder %s77, %s80
      %p86 = scmp.eq.s32.totalorder %s20, 0
      %p87 = por %p85, %p86
      %p88 = scmp.ne.s32.totalorder %s77, %s80
      %p89 = scmp.eq.s32.totalorder %s25, 3
      %p90 = por %p88, %p89
      %p91 = scmp.ne.s32.totalorder %s80, %s81
      %p92 = scmp.eq.s32.totalorder %s25, 0
      %p93 = por %p91, %p92
      %p94 = scmp.ne.s32.totalorder %s80, %s81
      %p95 = scmp.eq.s32.totalorder %s26, 3
      %p96 = por %p94, %p95
      %p98 = scmp.ne.s32.totalorder %s81, %s97
      %p99 = scmp.eq.s32.totalorder %s26, 0
      %p100 = por %p98, %p99
      %s101 = ssub.s32 %s20, %s27
      %p102 = scmp.eq.s32.totalorder %s101, 0
      %s104 = sadd.s32 %s103, 1
      %s105 = scalar_select %p102, %s103, %s104
      %p108 = pneg %p102
      %p109 = scmp.eq.s32.totalorder %s20, 3
      %p110 = por %p108, %p109
      %p111 = scmp.ne.s32.totalorder %s103, %s106
      %p112 = scmp.eq.s32.totalorder %s20, 0
      %p113 = por %p111, %p112
      %p114 = scmp.ne.s32.totalorder %s103, %s106
      %p115 = scmp.eq.s32.totalorder %s25, 3
      %p116 = por %p114, %p115
      %p117 = scmp.ne.s32.totalorder %s106, %s107
      %p118 = scmp.eq.s32.totalorder %s25, 0
      %p119 = por %p117, %p118
      %p120 = scmp.ne.s32.totalorder %s106, %s107
      %p121 = scmp.eq.s32.totalorder %s26, 3
      %p122 = por %p120, %p121
      %p124 = scmp.ne.s32.totalorder %s107, %s123
      %p125 = scmp.eq.s32.totalorder %s26, 0
      %p126 = por %p124, %p125
      %p127 = scmp.le.s32.totalorder 1, %s20
      %p128 = scmp.lt.s32.totalorder %s20, 5
      %p129 = pnand %p127, %p128
      %p130 = pneg %p129
      // Predicated region
      $region9: #{tpu_custom_call.1} parent=5 // pred_check
        _
      $region10: #{tpu_custom_call.1} parent=5 // pred_check_branch
        %132 = sbr.rel (%p129) target = $region12
      $region11: #{tpu_custom_call.1} parent=5 // pred_region
        %s133 = ssub.s32 %s20, 1
        // Predicated region
        $region13: #{tpu_custom_call.1} parent=11 // pred_check
          %p134 = pneg %p67
        $region14: #{tpu_custom_call.1} parent=11 // pred_check_branch
          %136 = sbr.rel (%p134) target = $region16
        $region15: #{tpu_custom_call.1} parent=11 // pred_region
          %s138 = ssub.s32 5248, 5248
          %139 = vsyncadd [#allocation6], %s138
          %s140 = sshll.u32 [#allocation5], 4
          %s141 = int_to_ptr.vmem [resolvable:$true] %s140
          %146 = dma.hbm_to_vmem [thread:$0]  %s1, 5248, %s141, [#allocation6], 64, 64, 4
        $region16: #{tpu_custom_call.1} parent=11 // pred_fallthru
          _
      $region12: #{tpu_custom_call.1} parent=5 // pred_fallthru
        _
      %p147 = scmp.lt.s32.totalorder %s20, 4
      // Predicated region
      $region17: #{tpu_custom_call.1} parent=5 // pred_check
        %p148 = pneg %p147
      $region18: #{tpu_custom_call.1} parent=5 // pred_check_branch
        %150 = sbr.rel (%p148) target = $region20
      $region19: #{tpu_custom_call.1} parent=5 // pred_region
        // Predicated region
        $region21: #{tpu_custom_call.1} parent=19 // pred_check
          %p151 = pneg %p40
        $region22: #{tpu_custom_call.1} parent=19 // pred_check_branch
          %153 = sbr.rel (%p151) target = $region24
        $region23: #{tpu_custom_call.1} parent=19 // pred_region
          #allocation11 [shape = 'u32[6]{0}', space=smem, size = 0x18, scoped, tag = 'DMA stride descriptor']
          %s154 = sand.u32 %s30, 1
          %s155 = scalar_lea.sflag [#allocation3], %s154
          %s156 = sand.u32 %s30, 1
          %s157 = smul.addr %s156, 256
          %s158 = scalar_lea.vmem [#allocation2], %s157
          %s159 = smul.u32 16, %s20
          %s161 = ssub.s32 4096, 4096
          %162 = vsyncadd %s155, %s161
          %s163 = smul.addr %s159, 128
          %s164 = scalar_lea.hbm %s0, %s163
          %s166 = sshll.u32 1, 14
          %s167 = sxor.u32 4294967295, %s166
          %s169 = sld [smem:[#allocation0]]
          %s170 = sadd.s32 2, %s169
          %s172 = sshll.u32 7, 26
          %s173 = sxor.u32 4294967295, %s172
          %s174 = sand.u32 0, %s173
          %s175 = sshll.u32 %s170, 26
          %s176 = sor.u32 %s174, %s175
          %s177 = sshll.u32 %s158, 4
          %s178 = int_to_ptr.vmem [resolvable:$true] %s177
          %184 = sst [smem:[#allocation11]] 8192
          %s185 = scalar_lea.smem [#allocation11], 1
          %186 = sst [smem:[%s185]] 2048
          %s187 = scalar_lea.smem [#allocation11], 2
          %188 = sst [smem:[%s187]] 16
          %s189 = scalar_lea.smem [#allocation11], 3
          %190 = sst [smem:[%s189]] 128
          %s191 = scalar_lea.smem [#allocation11], 4
          %192 = sst [smem:[%s191]] 128
          %s193 = scalar_lea.smem [#allocation11], 5
          %194 = sst [smem:[%s193]] 8
          %196 = dma.general %s164, 4096, %s178, %s155, 131072, [#allocation11], %s176, 0
        $region24: #{tpu_custom_call.1} parent=19 // pred_fallthru
          _
      $region20: #{tpu_custom_call.1} parent=5 // pred_fallthru
        _
      %p197 = scmp.le.s32.totalorder 1, %s20
      %p198 = scmp.lt.s32.totalorder %s20, 5
      %p199 = pnand %p197, %p198
      %p200 = pneg %p199
      // Predicated region
      $region25: #{tpu_custom_call.1} parent=5 // pred_check
        _
      $region26: #{tpu_custom_call.1} parent=5 // pred_check_branch
        %202 = sbr.rel (%p199) target = $region28
      $region27: #{tpu_custom_call.1} parent=5 // pred_region
        %s203 = ssub.s32 %s20, 1
        %s204 = sand.u32 %s33, 1
        %s205 = scalar_lea.sflag [#allocation3], %s204
        %s206 = sand.u32 %s33, 1
        %s207 = smul.addr %s206, 256
        %s208 = scalar_lea.vmem [#allocation2], %s207
        // Predicated region
        $region29: #{tpu_custom_call.1} parent=27 // pred_check
          %p209 = pneg %p46
        $region30: #{tpu_custom_call.1} parent=27 // pred_check_branch
          %211 = sbr.rel (%p209) target = $region32
        $region31: #{tpu_custom_call.1} parent=27 // pred_region
          %212 = dma.done %s205, 4096
        $region32: #{tpu_custom_call.1} parent=27 // pred_fallthru
          _
        // Predicated region
        $region33: #{tpu_custom_call.1} parent=27 // pred_check
          %p213 = pneg %p67
        $region34: #{tpu_custom_call.1} parent=27 // pred_check_branch
          %215 = sbr.rel (%p213) target = $region36
        $region35: #{tpu_custom_call.1} parent=27 // pred_region
          %216 = dma.done [#allocation6], 5248
        $region36: #{tpu_custom_call.1} parent=27 // pred_fallthru
          _
        %s217 = sand.u32 %s33, 1
        %s218 = scalar_lea.sflag [#allocation3], %s217
        %s219 = sand.u32 %s33, 1
        %s220 = smul.addr %s219, 256
        %s221 = scalar_lea.vmem [#allocation2], %s220
        %p222 = pneg %p46
        %p223 = pneg %p43
        %p224 = pneg %p67
        %p225 = pneg %p64
        %p226 = pneg %p93
        %p227 = pneg %p90
        %s228 = sand.u32 %s80, 1
        %s229 = scalar_lea.sflag [#allocation4], %s228
        %s230 = sand.u32 %s80, 1
        %s231 = smul.addr %s230, 128
        %s232 = scalar_lea.vmem [#allocation7], %s231
        %p233 = pneg %p119
        %p234 = pneg %p116
        %s235 = sand.u32 %s106, 1
        %s236 = scalar_lea.sflag [#allocation9], %s235
        %s237 = sand.u32 %s106, 1
        %s238 = smul.addr %s237, 2
        %s239 = scalar_lea.vmem [#allocation8], %s238
        %s240 = smul.u32 16, %s25
        %s241 = smul.u32 16, %s25
        %v243 = vld [vmem:[%s208] sm:$0xff]
        %v244 = vld [vmem:[%s208 + $0x8] sm:$0xff]
        %v245 = vld [vmem:[%s208 + $0x10] sm:$0xff]
        %v246 = vld [vmem:[%s208 + $0x18] sm:$0xff]
        %v247 = vld [vmem:[%s208 + $0x20] sm:$0xff]
        %v248 = vld [vmem:[%s208 + $0x28] sm:$0xff]
        %v249 = vld [vmem:[%s208 + $0x30] sm:$0xff]
        %v250 = vld [vmem:[%s208 + $0x38] sm:$0xff]
        %v251 = vld [vmem:[%s208 + $0x40] sm:$0xff]
        %v252 = vld [vmem:[%s208 + $0x48] sm:$0xff]
        %v253 = vld [vmem:[%s208 + $0x50] sm:$0xff]
        %v254 = vld [vmem:[%s208 + $0x58] sm:$0xff]
        %v255 = vld [vmem:[%s208 + $0x60] sm:$0xff]
        %v256 = vld [vmem:[%s208 + $0x68] sm:$0xff]
        %v257 = vld [vmem:[%s208 + $0x70] sm:$0xff]
        %v258 = vld [vmem:[%s208 + $0x78] sm:$0xff]
        %s259 = scalar_lea.vmem %s208, 128 [#allocation2]
        %v260 = vld [vmem:[%s259] sm:$0xff]
        %v261 = vld [vmem:[%s259 + $0x8] sm:$0xff]
        %v262 = vld [vmem:[%s259 + $0x10] sm:$0xff]
        %v263 = vld [vmem:[%s259 + $0x18] sm:$0xff]
        %v264 = vld [vmem:[%s259 + $0x20] sm:$0xff]
        %v265 = vld [vmem:[%s259 + $0x28] sm:$0xff]
        %v266 = vld [vmem:[%s259 + $0x30] sm:$0xff]
        %v267 = vld [vmem:[%s259 + $0x38] sm:$0xff]
        %v268 = vld [vmem:[%s259 + $0x40] sm:$0xff]
        %v269 = vld [vmem:[%s259 + $0x48] sm:$0xff]
        %v270 = vld [vmem:[%s259 + $0x50] sm:$0xff]
        %v271 = vld [vmem:[%s259 + $0x58] sm:$0xff]
        %v272 = vld [vmem:[%s259 + $0x60] sm:$0xff]
        %v273 = vld [vmem:[%s259 + $0x68] sm:$0xff]
        %v274 = vld [vmem:[%s259 + $0x70] sm:$0xff]
        %v275 = vld [vmem:[%s259 + $0x78] sm:$0xff]
        %v276 = vld [vmem:[#allocation5 + $0x140] sm:$0xf]
        %v277 = vunpack.c.l.bf16 %v276
        %v278 = vld [vmem:[#allocation5] sm:$0xf]
        %v279 = vld [vmem:[#allocation5 + $0x4] sm:$0xf]
        %v280 = vld [vmem:[#allocation5 + $0x8] sm:$0xf]
        %v281 = vld [vmem:[#allocation5 + $0xc] sm:$0xf]
        %v282 = vld [vmem:[#allocation5 + $0x10] sm:$0xf]
        %v283 = vld [vmem:[#allocation5 + $0x14] sm:$0xf]
        %v284 = vld [vmem:[#allocation5 + $0x18] sm:$0xf]
        %v285 = vld [vmem:[#allocation5 + $0x1c] sm:$0xf]
        %v286 = vld [vmem:[#allocation5 + $0x20] sm:$0xf]
        %v287 = vld [vmem:[#allocation5 + $0x24] sm:$0xf]
        %v288 = vld [vmem:[#allocation5 + $0x28] sm:$0xf]
        %v289 = vld [vmem:[#allocation5 + $0x2c] sm:$0xf]
        %v290 = vld [vmem:[#allocation5 + $0x30] sm:$0xf]
        %v291 = vld [vmem:[#allocation5 + $0x34] sm:$0xf]
        %v292 = vld [vmem:[#allocation5 + $0x38] sm:$0xf]
        %v293 = vld [vmem:[#allocation5 + $0x3c] sm:$0xf]
        %v294 = vpack.c.bf16 %v244, %v243
        %v295 = vpack.c.bf16 %v246, %v245
        %v296 = vpack.c.bf16 %v248, %v247
        %v297 = vpack.c.bf16 %v250, %v249
        %v298 = vpack.c.bf16 %v252, %v251
        %v299 = vpack.c.bf16 %v254, %v253
        %v300 = vpack.c.bf16 %v256, %v255
        %v301 = vpack.c.bf16 %v258, %v257
        %v302 = vlaneseq
        %v303 = vshrl.u32 %v302, 7
        %v304 = vsub.s32 0, %v303
        %v305 = vrot.slane %v277, %v304
        %v322 = vunpack.c.l.b16 %v278
        %v323 = vunpack.c.l.b16 %v279
        %v324 = vunpack.c.l.b16 %v280
        %v325 = vunpack.c.l.b16 %v281
        %v326 = vunpack.c.l.b16 %v282
        %v327 = vunpack.c.l.b16 %v283
        %v328 = vunpack.c.l.b16 %v284
        %v329 = vunpack.c.l.b16 %v285
        %v330 = vunpack.c.l.b16 %v286
        %v331 = vunpack.c.l.b16 %v287
        %v332 = vunpack.c.l.b16 %v288
        %v333 = vunpack.c.l.b16 %v289
        %v334 = vunpack.c.l.b16 %v290
        %v335 = vunpack.c.l.b16 %v291
        %v336 = vunpack.c.l.b16 %v292
        %v337 = vunpack.c.l.b16 %v293
        %v338 = vpack.c.b16 %v323, %v322
        %v339 = vpack.c.b16 %v325, %v324
        %v340 = vpack.c.b16 %v327, %v326
        %v341 = vpack.c.b16 %v329, %v328
        %v342 = vpack.c.b16 %v331, %v330
        %v343 = vpack.c.b16 %v333, %v332
        %v344 = vpack.c.b16 %v335, %v334
        %v345 = vpack.c.b16 %v337, %v336
        %354 = vmatprep.subr.bf16.mxu0 0
        %355 = vmatpush1.bf16.msra.mxu0 %v345
        %356 = vmatprep.subr.bf16.mxu0 0
        %357 = vmatpush1.bf16.msra.mxu0 %v344
        %358 = vmatprep.subr.bf16.mxu0 0
        %359 = vmatpush1.bf16.msra.mxu0 %v343
        %360 = vmatprep.subr.bf16.mxu0 0
        %361 = vmatpush1.bf16.msra.mxu0 %v342
        %362 = vmatprep.subr.bf16.mxu0 0
        %363 = vmatpush1.bf16.msra.mxu0 %v341
        %364 = vmatprep.subr.bf16.mxu0 0
        %365 = vmatpush1.bf16.msra.mxu0 %v340
        %366 = vmatprep.subr.bf16.mxu0 0
        %367 = vmatpush1.bf16.msra.mxu0 %v339
        %368 = vmatprep.subr.bf16.mxu0 0
        %369 = vmatpush1.bf16.msra.mxu0 %v338
        %370 = vmatprep.subr.bf16.mxu0 0
        %371 = vmatpush2.bf16.msra.mxu0 0
        %372 = vmatprep.subr.bf16.mxu0 0
        %373 = vmatpush2.bf16.msra.mxu0 0
        %374 = vmatprep.subr.bf16.mxu0 0
        %375 = vmatpush2.bf16.msra.mxu0 0
        %376 = vmatprep.subr.bf16.mxu0 0
        %377 = vmatpush2.bf16.msra.mxu0 0
        %378 = vmatprep.subr.bf16.mxu0 0
        %379 = vmatpush2.bf16.msra.mxu0 0
        %380 = vmatprep.subr.bf16.mxu0 0
        %381 = vmatpush2.bf16.msra.mxu0 0
        %382 = vmatprep.subr.bf16.mxu0 0
        %383 = vmatpush2.bf16.msra.mxu0 0
        %384 = vmatprep.subr.bf16.mxu0 0
        %385 = vmatpush2.bf16.msra.mxu0 0
        %386 = vmatprep.mubr.bf16.mxu0 0
        %387 = vmatmul.mubr.bf16.gmra.mxu0 %v294
        %v388 = vpop.f32.mrf.mxu0
        %v389 = vadd.f32 %v305, %v388
        %v390 = vpop.f32.mrf.mxu0
        %v391 = vpop.f32.mrf.mxu0
        %v392 = vadd.f32 %v305, %v391
        %v393 = vpop.f32.mrf.mxu0
        %394 = vmatprep.mubr.bf16.mxu0 0
        %395 = vmatmul.mubr.bf16.gmra.mxu0 %v295
        %v396 = vpop.f32.mrf.mxu0
        %v397 = vadd.f32 %v305, %v396
        %v398 = vpop.f32.mrf.mxu0
        %v399 = vpop.f32.mrf.mxu0
        %v400 = vadd.f32 %v305, %v399
        %v401 = vpop.f32.mrf.mxu0
        %402 = vmatprep.mubr.bf16.mxu0 0
        %403 = vmatmul.mubr.bf16.gmra.mxu0 %v296
        %v404 = vpop.f32.mrf.mxu0
        %v405 = vadd.f32 %v305, %v404
        %v406 = vpop.f32.mrf.mxu0
        %v407 = vpop.f32.mrf.mxu0
        %v408 = vadd.f32 %v305, %v407
        %v409 = vpop.f32.mrf.mxu0
        %410 = vmatprep.mubr.bf16.mxu0 0
        %411 = vmatmul.mubr.bf16.gmra.mxu0 %v297
        %v412 = vpop.f32.mrf.mxu0
        %v413 = vadd.f32 %v305, %v412
        %v414 = vpop.f32.mrf.mxu0
        %v415 = vpop.f32.mrf.mxu0
        %v416 = vadd.f32 %v305, %v415
        %v417 = vpop.f32.mrf.mxu0
        %418 = vmatprep.mubr.bf16.mxu0 0
        %419 = vmatmul.mubr.bf16.gmra.mxu0 %v298
        %v420 = vpop.f32.mrf.mxu0
        %v421 = vadd.f32 %v305, %v420
        %v422 = vpop.f32.mrf.mxu0
        %v423 = vpop.f32.mrf.mxu0
        %v424 = vadd.f32 %v305, %v423
        %v425 = vpop.f32.mrf.mxu0
        %426 = vmatprep.mubr.bf16.mxu0 0
        %427 = vmatmul.mubr.bf16.gmra.mxu0 %v299
        %v428 = vpop.f32.mrf.mxu0
        %v429 = vadd.f32 %v305, %v428
        %v430 = vpop.f32.mrf.mxu0
        %v431 = vpop.f32.mrf.mxu0
        %v432 = vadd.f32 %v305, %v431
        %v433 = vpop.f32.mrf.mxu0
        %434 = vmatprep.mubr.bf16.mxu0 0
        %435 = vmatmul.mubr.bf16.gmra.mxu0 %v300
        %v436 = vpop.f32.mrf.mxu0
        %v437 = vadd.f32 %v305, %v436
        %v438 = vpop.f32.mrf.mxu0
        %v439 = vpop.f32.mrf.mxu0
        %v440 = vadd.f32 %v305, %v439
        %v441 = vpop.f32.mrf.mxu0
        %442 = vmatprep.mubr.bf16.mxu0 0
        %443 = vmatmul.mubr.bf16.gmra.mxu0 %v301
        %v444 = vpop.f32.mrf.mxu0
        %v445 = vadd.f32 %v305, %v444
        %v446 = vpop.f32.mrf.mxu0
        %v447 = vpop.f32.mrf.mxu0
        %v448 = vadd.f32 %v305, %v447
        %v449 = vpop.f32.mrf.mxu0
        %450 = vdwg.mxu0
        %v451 = vtanh.pop %v389
        %v452 = vtanh.pop %v392
        %v453 = vtanh.pop %v397
        %v454 = vtanh.pop %v400
        %v455 = vtanh.pop %v405
        %v456 = vtanh.pop %v408
        %v457 = vtanh.pop %v413
        %v458 = vtanh.pop %v416
        %v459 = vtanh.pop %v421
        %v460 = vtanh.pop %v424
        %v461 = vtanh.pop %v429
        %v462 = vtanh.pop %v432
        %v463 = vtanh.pop %v437
        %v464 = vtanh.pop %v440
        %v465 = vtanh.pop %v445
        %v466 = vtanh.pop %v448
        %v467 = vld [vmem:[#allocation5 + $0x40] sm:$0xf]
        %v468 = vld [vmem:[#allocation5 + $0x44] sm:$0xf]
        %v469 = vld [vmem:[#allocation5 + $0x48] sm:$0xf]
        %v470 = vld [vmem:[#allocation5 + $0x4c] sm:$0xf]
        %v471 = vld [vmem:[#allocation5 + $0x50] sm:$0xf]
        %v472 = vld [vmem:[#allocation5 + $0x54] sm:$0xf]
        %v473 = vld [vmem:[#allocation5 + $0x58] sm:$0xf]
        %v474 = vld [vmem:[#allocation5 + $0x5c] sm:$0xf]
        %v475 = vld [vmem:[#allocation5 + $0x60] sm:$0xf]
        %v476 = vld [vmem:[#allocation5 + $0x64] sm:$0xf]
        %v477 = vld [vmem:[#allocation5 + $0x68] sm:$0xf]
        %v478 = vld [vmem:[#allocation5 + $0x6c] sm:$0xf]
        %v479 = vld [vmem:[#allocation5 + $0x70] sm:$0xf]
        %v480 = vld [vmem:[#allocation5 + $0x74] sm:$0xf]
        %v481 = vld [vmem:[#allocation5 + $0x78] sm:$0xf]
        %v482 = vld [vmem:[#allocation5 + $0x7c] sm:$0xf]
        %v483 = vpack.c.bf16 %v452, %v451
        %v484 = vpack.c.bf16 %v454, %v453
        %v485 = vpack.c.bf16 %v456, %v455
        %v486 = vpack.c.bf16 %v458, %v457
        %v487 = vpack.c.bf16 %v460, %v459
        %v488 = vpack.c.bf16 %v462, %v461
        %v489 = vpack.c.bf16 %v464, %v463
        %v490 = vpack.c.bf16 %v466, %v465
        %v491 = vlaneseq
        %v492 = vshrl.u32 %v491, 7
        %v493 = vsub.s32 1, %v492
        %v494 = vrot.slane %v277, %v493
        %v511 = vunpack.c.l.b16 %v467
        %v512 = vunpack.c.l.b16 %v468
        %v513 = vunpack.c.l.b16 %v469
        %v514 = vunpack.c.l.b16 %v470
        %v515 = vunpack.c.l.b16 %v471
        %v516 = vunpack.c.l.b16 %v472
        %v517 = vunpack.c.l.b16 %v473
        %v518 = vunpack.c.l.b16 %v474
        %v519 = vunpack.c.l.b16 %v475
        %v520 = vunpack.c.l.b16 %v476
        %v521 = vunpack.c.l.b16 %v477
        %v522 = vunpack.c.l.b16 %v478
        %v523 = vunpack.c.l.b16 %v479
        %v524 = vunpack.c.l.b16 %v480
        %v525 = vunpack.c.l.b16 %v481
        %v526 = vunpack.c.l.b16 %v482
        %v527 = vpack.c.b16 %v512, %v511
        %v528 = vpack.c.b16 %v514, %v513
        %v529 = vpack.c.b16 %v516, %v515
        %v530 = vpack.c.b16 %v518, %v517
        %v531 = vpack.c.b16 %v520, %v519
        %v532 = vpack.c.b16 %v522, %v521
        %v533 = vpack.c.b16 %v524, %v523
        %v534 = vpack.c.b16 %v526, %v525
        %543 = vmatprep.subr.bf16.mxu0 0
        %544 = vmatpush1.bf16.msra.mxu0 %v534
        %545 = vmatprep.subr.bf16.mxu0 0
        %546 = vmatpush1.bf16.msra.mxu0 %v533
        %547 = vmatprep.subr.bf16.mxu0 0
        %548 = vmatpush1.bf16.msra.mxu0 %v532
        %549 = vmatprep.subr.bf16.mxu0 0
        %550 = vmatpush1.bf16.msra.mxu0 %v531
        %551 = vmatprep.subr.bf16.mxu0 0
        %552 = vmatpush1.bf16.msra.mxu0 %v530
        %553 = vmatprep.subr.bf16.mxu0 0
        %554 = vmatpush1.bf16.msra.mxu0 %v529
        %555 = vmatprep.subr.bf16.mxu0 0
        %556 = vmatpush1.bf16.msra.mxu0 %v528
        %557 = vmatprep.subr.bf16.mxu0 0
        %558 = vmatpush1.bf16.msra.mxu0 %v527
        %559 = vmatprep.subr.bf16.mxu0 0
        %560 = vmatpush2.bf16.msra.mxu0 0
        %561 = vmatprep.subr.bf16.mxu0 0
        %562 = vmatpush2.bf16.msra.mxu0 0
        %563 = vmatprep.subr.bf16.mxu0 0
        %564 = vmatpush2.bf16.msra.mxu0 0
        %565 = vmatprep.subr.bf16.mxu0 0
        %566 = vmatpush2.bf16.msra.mxu0 0
        %567 = vmatprep.subr.bf16.mxu0 0
        %568 = vmatpush2.bf16.msra.mxu0 0
        %569 = vmatprep.subr.bf16.mxu0 0
        %570 = vmatpush2.bf16.msra.mxu0 0
        %571 = vmatprep.subr.bf16.mxu0 0
        %572 = vmatpush2.bf16.msra.mxu0 0
        %573 = vmatprep.subr.bf16.mxu0 0
        %574 = vmatpush2.bf16.msra.mxu0 0
        %575 = vmatprep.mubr.bf16.mxu0 0
        %576 = vmatmul.mubr.bf16.gmra.mxu0 %v483
        %v577 = vpop.f32.mrf.mxu0
        %v578 = vadd.f32 %v494, %v577
        %v579 = vpop.f32.mrf.mxu0
        %v580 = vpop.f32.mrf.mxu0
        %v581 = vadd.f32 %v494, %v580
        %v582 = vpop.f32.mrf.mxu0
        %583 = vmatprep.mubr.bf16.mxu0 0
        %584 = vmatmul.mubr.bf16.gmra.mxu0 %v484
        %v585 = vpop.f32.mrf.mxu0
        %v586 = vadd.f32 %v494, %v585
        %v587 = vpop.f32.mrf.mxu0
        %v588 = vpop.f32.mrf.mxu0
        %v589 = vadd.f32 %v494, %v588
        %v590 = vpop.f32.mrf.mxu0
        %591 = vmatprep.mubr.bf16.mxu0 0
        %592 = vmatmul.mubr.bf16.gmra.mxu0 %v485
        %v593 = vpop.f32.mrf.mxu0
        %v594 = vadd.f32 %v494, %v593
        %v595 = vpop.f32.mrf.mxu0
        %v596 = vpop.f32.mrf.mxu0
        %v597 = vadd.f32 %v494, %v596
        %v598 = vpop.f32.mrf.mxu0
        %599 = vmatprep.mubr.bf16.mxu0 0
        %600 = vmatmul.mubr.bf16.gmra.mxu0 %v486
        %v601 = vpop.f32.mrf.mxu0
        %v602 = vadd.f32 %v494, %v601
        %v603 = vpop.f32.mrf.mxu0
        %v604 = vpop.f32.mrf.mxu0
        %v605 = vadd.f32 %v494, %v604
        %v606 = vpop.f32.mrf.mxu0
        %607 = vmatprep.mubr.bf16.mxu0 0
        %608 = vmatmul.mubr.bf16.gmra.mxu0 %v487
        %v609 = vpop.f32.mrf.mxu0
        %v610 = vadd.f32 %v494, %v609
        %v611 = vpop.f32.mrf.mxu0
        %v612 = vpop.f32.mrf.mxu0
        %v613 = vadd.f32 %v494, %v612
        %v614 = vpop.f32.mrf.mxu0
        %615 = vmatprep.mubr.bf16.mxu0 0
        %616 = vmatmul.mubr.bf16.gmra.mxu0 %v488
        %v617 = vpop.f32.mrf.mxu0
        %v618 = vadd.f32 %v494, %v617
        %v619 = vpop.f32.mrf.mxu0
        %v620 = vpop.f32.mrf.mxu0
        %v621 = vadd.f32 %v494, %v620
        %v622 = vpop.f32.mrf.mxu0
        %623 = vmatprep.mubr.bf16.mxu0 0
        %624 = vmatmul.mubr.bf16.gmra.mxu0 %v489
        %v625 = vpop.f32.mrf.mxu0
        %v626 = vadd.f32 %v494, %v625
        %v627 = vpop.f32.mrf.mxu0
        %v628 = vpop.f32.mrf.mxu0
        %v629 = vadd.f32 %v494, %v628
        %v630 = vpop.f32.mrf.mxu0
        %631 = vmatprep.mubr.bf16.mxu0 0
        %632 = vmatmul.mubr.bf16.gmra.mxu0 %v490
        %v633 = vpop.f32.mrf.mxu0
        %v634 = vadd.f32 %v494, %v633
        %v635 = vpop.f32.mrf.mxu0
        %v636 = vpop.f32.mrf.mxu0
        %v637 = vadd.f32 %v494, %v636
        %v638 = vpop.f32.mrf.mxu0
        %639 = vdwg.mxu0
        %v640 = vld [vmem:[#allocation5 + $0x80] sm:$0xf]
        %v641 = vld [vmem:[#allocation5 + $0x84] sm:$0xf]
        %v642 = vld [vmem:[#allocation5 + $0x88] sm:$0xf]
        %v643 = vld [vmem:[#allocation5 + $0x8c] sm:$0xf]
        %v644 = vld [vmem:[#allocation5 + $0x90] sm:$0xf]
        %v645 = vld [vmem:[#allocation5 + $0x94] sm:$0xf]
        %v646 = vld [vmem:[#allocation5 + $0x98] sm:$0xf]
        %v647 = vld [vmem:[#allocation5 + $0x9c] sm:$0xf]
        %v648 = vld [vmem:[#allocation5 + $0xa0] sm:$0xf]
        %v649 = vld [vmem:[#allocation5 + $0xa4] sm:$0xf]
        %v650 = vld [vmem:[#allocation5 + $0xa8] sm:$0xf]
        %v651 = vld [vmem:[#allocation5 + $0xac] sm:$0xf]
        %v652 = vld [vmem:[#allocation5 + $0xb0] sm:$0xf]
        %v653 = vld [vmem:[#allocation5 + $0xb4] sm:$0xf]
        %v654 = vld [vmem:[#allocation5 + $0xb8] sm:$0xf]
        %v655 = vld [vmem:[#allocation5 + $0xbc] sm:$0xf]
        %v656 = vlaneseq
        %v657 = vshrl.u32 %v656, 7
        %v658 = vsub.s32 2, %v657
        %v659 = vrot.slane %v277, %v658
        %v676 = vunpack.c.l.b16 %v640
        %v677 = vunpack.c.l.b16 %v641
        %v678 = vunpack.c.l.b16 %v642
        %v679 = vunpack.c.l.b16 %v643
        %v680 = vunpack.c.l.b16 %v644
        %v681 = vunpack.c.l.b16 %v645
        %v682 = vunpack.c.l.b16 %v646
        %v683 = vunpack.c.l.b16 %v647
        %v684 = vunpack.c.l.b16 %v648
        %v685 = vunpack.c.l.b16 %v649
        %v686 = vunpack.c.l.b16 %v650
        %v687 = vunpack.c.l.b16 %v651
        %v688 = vunpack.c.l.b16 %v652
        %v689 = vunpack.c.l.b16 %v653
        %v690 = vunpack.c.l.b16 %v654
        %v691 = vunpack.c.l.b16 %v655
        %v692 = vpack.c.b16 %v677, %v676
        %v693 = vpack.c.b16 %v679, %v678
        %v694 = vpack.c.b16 %v681, %v680
        %v695 = vpack.c.b16 %v683, %v682
        %v696 = vpack.c.b16 %v685, %v684
        %v697 = vpack.c.b16 %v687, %v686
        %v698 = vpack.c.b16 %v689, %v688
        %v699 = vpack.c.b16 %v691, %v690
        %708 = vmatprep.subr.bf16.mxu0 0
        %709 = vmatpush1.bf16.msra.mxu0 %v699
        %710 = vmatprep.subr.bf16.mxu0 0
        %711 = vmatpush1.bf16.msra.mxu0 %v698
        %712 = vmatprep.subr.bf16.mxu0 0
        %713 = vmatpush1.bf16.msra.mxu0 %v697
        %714 = vmatprep.subr.bf16.mxu0 0
        %715 = vmatpush1.bf16.msra.mxu0 %v696
        %716 = vmatprep.subr.bf16.mxu0 0
        %717 = vmatpush1.bf16.msra.mxu0 %v695
        %718 = vmatprep.subr.bf16.mxu0 0
        %719 = vmatpush1.bf16.msra.mxu0 %v694
        %720 = vmatprep.subr.bf16.mxu0 0
        %721 = vmatpush1.bf16.msra.mxu0 %v693
        %722 = vmatprep.subr.bf16.mxu0 0
        %723 = vmatpush1.bf16.msra.mxu0 %v692
        %724 = vmatprep.subr.bf16.mxu0 0
        %725 = vmatpush2.bf16.msra.mxu0 0
        %726 = vmatprep.subr.bf16.mxu0 0
        %727 = vmatpush2.bf16.msra.mxu0 0
        %728 = vmatprep.subr.bf16.mxu0 0
        %729 = vmatpush2.bf16.msra.mxu0 0
        %730 = vmatprep.subr.bf16.mxu0 0
        %731 = vmatpush2.bf16.msra.mxu0 0
        %732 = vmatprep.subr.bf16.mxu0 0
        %733 = vmatpush2.bf16.msra.mxu0 0
        %734 = vmatprep.subr.bf16.mxu0 0
        %735 = vmatpush2.bf16.msra.mxu0 0
        %736 = vmatprep.subr.bf16.mxu0 0
        %737 = vmatpush2.bf16.msra.mxu0 0
        %738 = vmatprep.subr.bf16.mxu0 0
        %739 = vmatpush2.bf16.msra.mxu0 0
        %740 = vmatprep.mubr.bf16.mxu0 0
        %741 = vmatmul.mubr.bf16.gmra.mxu0 %v483
        %v742 = vpop.f32.mrf.mxu0
        %v743 = vadd.f32 %v659, %v742
        %v744 = vpop.f32.mrf.mxu0
        %v745 = vpop.f32.mrf.mxu0
        %v746 = vadd.f32 %v659, %v745
        %v747 = vpop.f32.mrf.mxu0
        %748 = vmatprep.mubr.bf16.mxu0 0
        %749 = vmatmul.mubr.bf16.gmra.mxu0 %v484
        %v750 = vpop.f32.mrf.mxu0
        %v751 = vadd.f32 %v659, %v750
        %v752 = vpop.f32.mrf.mxu0
        %v753 = vpop.f32.mrf.mxu0
        %v754 = vadd.f32 %v659, %v753
        %v755 = vpop.f32.mrf.mxu0
        %756 = vmatprep.mubr.bf16.mxu0 0
        %757 = vmatmul.mubr.bf16.gmra.mxu0 %v485
        %v758 = vpop.f32.mrf.mxu0
        %v759 = vadd.f32 %v659, %v758
        %v760 = vpop.f32.mrf.mxu0
        %v761 = vpop.f32.mrf.mxu0
        %v762 = vadd.f32 %v659, %v761
        %v763 = vpop.f32.mrf.mxu0
        %764 = vmatprep.mubr.bf16.mxu0 0
        %765 = vmatmul.mubr.bf16.gmra.mxu0 %v486
        %v766 = vpop.f32.mrf.mxu0
        %v767 = vadd.f32 %v659, %v766
        %v768 = vpop.f32.mrf.mxu0
        %v769 = vpop.f32.mrf.mxu0
        %v770 = vadd.f32 %v659, %v769
        %v771 = vpop.f32.mrf.mxu0
        %772 = vmatprep.mubr.bf16.mxu0 0
        %773 = vmatmul.mubr.bf16.gmra.mxu0 %v487
        %v774 = vpop.f32.mrf.mxu0
        %v775 = vadd.f32 %v659, %v774
        %v776 = vpop.f32.mrf.mxu0
        %v777 = vpop.f32.mrf.mxu0
        %v778 = vadd.f32 %v659, %v777
        %v779 = vpop.f32.mrf.mxu0
        %780 = vmatprep.mubr.bf16.mxu0 0
        %781 = vmatmul.mubr.bf16.gmra.mxu0 %v488
        %v782 = vpop.f32.mrf.mxu0
        %v783 = vadd.f32 %v659, %v782
        %v784 = vpop.f32.mrf.mxu0
        %v785 = vpop.f32.mrf.mxu0
        %v786 = vadd.f32 %v659, %v785
        %v787 = vpop.f32.mrf.mxu0
        %788 = vmatprep.mubr.bf16.mxu0 0
        %789 = vmatmul.mubr.bf16.gmra.mxu0 %v489
        %v790 = vpop.f32.mrf.mxu0
        %v791 = vadd.f32 %v659, %v790
        %v792 = vpop.f32.mrf.mxu0
        %v793 = vpop.f32.mrf.mxu0
        %v794 = vadd.f32 %v659, %v793
        %v795 = vpop.f32.mrf.mxu0
        %796 = vmatprep.mubr.bf16.mxu0 0
        %797 = vmatmul.mubr.bf16.gmra.mxu0 %v490
        %v798 = vpop.f32.mrf.mxu0
        %v799 = vadd.f32 %v659, %v798
        %v800 = vpop.f32.mrf.mxu0
        %v801 = vpop.f32.mrf.mxu0
        %v802 = vadd.f32 %v659, %v801
        %v803 = vpop.f32.mrf.mxu0
        %804 = vdwg.mxu0
        %v805 = vmul.f32 %v743, 0.5
        %v806 = vmul.f32 %v746, 0.5
        %v807 = vmul.f32 %v751, 0.5
        %v808 = vmul.f32 %v754, 0.5
        %v809 = vmul.f32 %v759, 0.5
        %v810 = vmul.f32 %v762, 0.5
        %v811 = vmul.f32 %v767, 0.5
        %v812 = vmul.f32 %v770, 0.5
        %v813 = vmul.f32 %v775, 0.5
        %v814 = vmul.f32 %v778, 0.5
        %v815 = vmul.f32 %v783, 0.5
        %v816 = vmul.f32 %v786, 0.5
        %v817 = vmul.f32 %v791, 0.5
        %v818 = vmul.f32 %v794, 0.5
        %v819 = vmul.f32 %v799, 0.5
        %v820 = vmul.f32 %v802, 0.5
        %v821 = vmul.f32 %v805, 1.442695
        %v822 = vpow.pop %v821
        %v823 = vmul.f32 %v806, 1.442695
        %v824 = vpow.pop %v823
        %v825 = vmul.f32 %v807, 1.442695
        %v826 = vpow.pop %v825
        %v827 = vmul.f32 %v808, 1.442695
        %v828 = vpow.pop %v827
        %v829 = vmul.f32 %v809, 1.442695
        %v830 = vpow.pop %v829
        %v831 = vmul.f32 %v810, 1.442695
        %v832 = vpow.pop %v831
        %v833 = vmul.f32 %v811, 1.442695
        %v834 = vpow.pop %v833
        %v835 = vmul.f32 %v812, 1.442695
        %v836 = vpow.pop %v835
        %v837 = vmul.f32 %v813, 1.442695
        %v838 = vpow.pop %v837
        %v839 = vmul.f32 %v814, 1.442695
        %v840 = vpow.pop %v839
        %v841 = vmul.f32 %v815, 1.442695
        %v842 = vpow.pop %v841
        %v843 = vmul.f32 %v816, 1.442695
        %v844 = vpow.pop %v843
        %v845 = vmul.f32 %v817, 1.442695
        %v846 = vpow.pop %v845
        %v847 = vmul.f32 %v818, 1.442695
        %v848 = vpow.pop %v847
        %v849 = vmul.f32 %v819, 1.442695
        %v850 = vpow.pop %v849
        %v851 = vmul.f32 %v820, 1.442695
        %v852 = vpow.pop %v851
        %v853 = vmul.f32 %v260, %v822
        %v854 = vmul.f32 %v261, %v824
        %v855 = vmul.f32 %v262, %v826
        %v856 = vmul.f32 %v263, %v828
        %v857 = vmul.f32 %v264, %v830
        %v858 = vmul.f32 %v265, %v832
        %v859 = vmul.f32 %v266, %v834
        %v860 = vmul.f32 %v267, %v836
        %v861 = vmul.f32 %v268, %v838
        %v862 = vmul.f32 %v269, %v840
        %v863 = vmul.f32 %v270, %v842
        %v864 = vmul.f32 %v271, %v844
        %v865 = vmul.f32 %v272, %v846
        %v866 = vmul.f32 %v273, %v848
        %v867 = vmul.f32 %v274, %v850
        %v868 = vmul.f32 %v275, %v852
        %v869 = vadd.f32 %v853, %v578
        %v870 = vadd.f32 %v854, %v581
        %v871 = vadd.f32 %v855, %v586
        %v872 = vadd.f32 %v856, %v589
        %v873 = vadd.f32 %v857, %v594
        %v874 = vadd.f32 %v858, %v597
        %v875 = vadd.f32 %v859, %v602
        %v876 = vadd.f32 %v860, %v605
        %v877 = vadd.f32 %v861, %v610
        %v878 = vadd.f32 %v862, %v613
        %v879 = vadd.f32 %v863, %v618
        %v880 = vadd.f32 %v864, %v621
        %v881 = vadd.f32 %v865, %v626
        %v882 = vadd.f32 %v866, %v629
        %v883 = vadd.f32 %v867, %v634
        %v884 = vadd.f32 %v868, %v637
        %v885 = vld [vmem:[#allocation5 + $0xc0] sm:$0xf]
        %v886 = vld [vmem:[#allocation5 + $0xc4] sm:$0xf]
        %v887 = vld [vmem:[#allocation5 + $0xc8] sm:$0xf]
        %v888 = vld [vmem:[#allocation5 + $0xcc] sm:$0xf]
        %v889 = vld [vmem:[#allocation5 + $0xd0] sm:$0xf]
        %v890 = vld [vmem:[#allocation5 + $0xd4] sm:$0xf]
        %v891 = vld [vmem:[#allocation5 + $0xd8] sm:$0xf]
        %v892 = vld [vmem:[#allocation5 + $0xdc] sm:$0xf]
        %v893 = vld [vmem:[#allocation5 + $0xe0] sm:$0xf]
        %v894 = vld [vmem:[#allocation5 + $0xe4] sm:$0xf]
        %v895 = vld [vmem:[#allocation5 + $0xe8] sm:$0xf]
        %v896 = vld [vmem:[#allocation5 + $0xec] sm:$0xf]
        %v897 = vld [vmem:[#allocation5 + $0xf0] sm:$0xf]
        %v898 = vld [vmem:[#allocation5 + $0xf4] sm:$0xf]
        %v899 = vld [vmem:[#allocation5 + $0xf8] sm:$0xf]
        %v900 = vld [vmem:[#allocation5 + $0xfc] sm:$0xf]
        %v901 = vpack.c.bf16 %v870, %v869
        %v902 = vpack.c.bf16 %v872, %v871
        %v903 = vpack.c.bf16 %v874, %v873
        %v904 = vpack.c.bf16 %v876, %v875
        %v905 = vpack.c.bf16 %v878, %v877
        %v906 = vpack.c.bf16 %v880, %v879
        %v907 = vpack.c.bf16 %v882, %v881
        %v908 = vpack.c.bf16 %v884, %v883
        %v909 = vlaneseq
        %v910 = vshrl.u32 %v909, 7
        %v911 = vsub.s32 3, %v910
        %v912 = vrot.slane %v277, %v911
        %v929 = vunpack.c.l.b16 %v885
        %v930 = vunpack.c.l.b16 %v886
        %v931 = vunpack.c.l.b16 %v887
        %v932 = vunpack.c.l.b16 %v888
        %v933 = vunpack.c.l.b16 %v889
        %v934 = vunpack.c.l.b16 %v890
        %v935 = vunpack.c.l.b16 %v891
        %v936 = vunpack.c.l.b16 %v892
        %v937 = vunpack.c.l.b16 %v893
        %v938 = vunpack.c.l.b16 %v894
        %v939 = vunpack.c.l.b16 %v895
        %v940 = vunpack.c.l.b16 %v896
        %v941 = vunpack.c.l.b16 %v897
        %v942 = vunpack.c.l.b16 %v898
        %v943 = vunpack.c.l.b16 %v899
        %v944 = vunpack.c.l.b16 %v900
        %v945 = vpack.c.b16 %v930, %v929
        %v946 = vpack.c.b16 %v932, %v931
        %v947 = vpack.c.b16 %v934, %v933
        %v948 = vpack.c.b16 %v936, %v935
        %v949 = vpack.c.b16 %v938, %v937
        %v950 = vpack.c.b16 %v940, %v939
        %v951 = vpack.c.b16 %v942, %v941
        %v952 = vpack.c.b16 %v944, %v943
        %961 = vmatprep.subr.bf16.mxu0 0
        %962 = vmatpush1.bf16.msra.mxu0 %v952
        %963 = vmatprep.subr.bf16.mxu0 0
        %964 = vmatpush1.bf16.msra.mxu0 %v951
        %965 = vmatprep.subr.bf16.mxu0 0
        %966 = vmatpush1.bf16.msra.mxu0 %v950
        %967 = vmatprep.subr.bf16.mxu0 0
        %968 = vmatpush1.bf16.msra.mxu0 %v949
        %969 = vmatprep.subr.bf16.mxu0 0
        %970 = vmatpush1.bf16.msra.mxu0 %v948
        %971 = vmatprep.subr.bf16.mxu0 0
        %972 = vmatpush1.bf16.msra.mxu0 %v947
        %973 = vmatprep.subr.bf16.mxu0 0
        %974 = vmatpush1.bf16.msra.mxu0 %v946
        %975 = vmatprep.subr.bf16.mxu0 0
        %976 = vmatpush1.bf16.msra.mxu0 %v945
        %977 = vmatprep.subr.bf16.mxu0 0
        %978 = vmatpush2.bf16.msra.mxu0 0
        %979 = vmatprep.subr.bf16.mxu0 0
        %980 = vmatpush2.bf16.msra.mxu0 0
        %981 = vmatprep.subr.bf16.mxu0 0
        %982 = vmatpush2.bf16.msra.mxu0 0
        %983 = vmatprep.subr.bf16.mxu0 0
        %984 = vmatpush2.bf16.msra.mxu0 0
        %985 = vmatprep.subr.bf16.mxu0 0
        %986 = vmatpush2.bf16.msra.mxu0 0
        %987 = vmatprep.subr.bf16.mxu0 0
        %988 = vmatpush2.bf16.msra.mxu0 0
        %989 = vmatprep.subr.bf16.mxu0 0
        %990 = vmatpush2.bf16.msra.mxu0 0
        %991 = vmatprep.subr.bf16.mxu0 0
        %992 = vmatpush2.bf16.msra.mxu0 0
        %993 = vmatprep.mubr.bf16.mxu0 0
        %994 = vmatmul.mubr.bf16.gmra.mxu0 %v901
        %v995 = vpop.f32.mrf.mxu0
        %v996 = vadd.f32 %v912, %v995
        %v997 = vpop.f32.mrf.mxu0
        %v998 = vpop.f32.mrf.mxu0
        %v999 = vadd.f32 %v912, %v998
        %v1000 = vpop.f32.mrf.mxu0
        %1001 = vmatprep.mubr.bf16.mxu0 0
        %1002 = vmatmul.mubr.bf16.gmra.mxu0 %v902
        %v1003 = vpop.f32.mrf.mxu0
        %v1004 = vadd.f32 %v912, %v1003
        %v1005 = vpop.f32.mrf.mxu0
        %v1006 = vpop.f32.mrf.mxu0
        %v1007 = vadd.f32 %v912, %v1006
        %v1008 = vpop.f32.mrf.mxu0
        %1009 = vmatprep.mubr.bf16.mxu0 0
        %1010 = vmatmul.mubr.bf16.gmra.mxu0 %v903
        %v1011 = vpop.f32.mrf.mxu0
        %v1012 = vadd.f32 %v912, %v1011
        %v1013 = vpop.f32.mrf.mxu0
        %v1014 = vpop.f32.mrf.mxu0
        %v1015 = vadd.f32 %v912, %v1014
        %v1016 = vpop.f32.mrf.mxu0
        %1017 = vmatprep.mubr.bf16.mxu0 0
        %1018 = vmatmul.mubr.bf16.gmra.mxu0 %v904
        %v1019 = vpop.f32.mrf.mxu0
        %v1020 = vadd.f32 %v912, %v1019
        %v1021 = vpop.f32.mrf.mxu0
        %v1022 = vpop.f32.mrf.mxu0
        %v1023 = vadd.f32 %v912, %v1022
        %v1024 = vpop.f32.mrf.mxu0
        %1025 = vmatprep.mubr.bf16.mxu0 0
        %1026 = vmatmul.mubr.bf16.gmra.mxu0 %v905
        %v1027 = vpop.f32.mrf.mxu0
        %v1028 = vadd.f32 %v912, %v1027
        %v1029 = vpop.f32.mrf.mxu0
        %v1030 = vpop.f32.mrf.mxu0
        %v1031 = vadd.f32 %v912, %v1030
        %v1032 = vpop.f32.mrf.mxu0
        %1033 = vmatprep.mubr.bf16.mxu0 0
        %1034 = vmatmul.mubr.bf16.gmra.mxu0 %v906
        %v1035 = vpop.f32.mrf.mxu0
        %v1036 = vadd.f32 %v912, %v1035
        %v1037 = vpop.f32.mrf.mxu0
        %v1038 = vpop.f32.mrf.mxu0
        %v1039 = vadd.f32 %v912, %v1038
        %v1040 = vpop.f32.mrf.mxu0
        %1041 = vmatprep.mubr.bf16.mxu0 0
        %1042 = vmatmul.mubr.bf16.gmra.mxu0 %v907
        %v1043 = vpop.f32.mrf.mxu0
        %v1044 = vadd.f32 %v912, %v1043
        %v1045 = vpop.f32.mrf.mxu0
        %v1046 = vpop.f32.mrf.mxu0
        %v1047 = vadd.f32 %v912, %v1046
        %v1048 = vpop.f32.mrf.mxu0
        %1049 = vmatprep.mubr.bf16.mxu0 0
        %1050 = vmatmul.mubr.bf16.gmra.mxu0 %v908
        %v1051 = vpop.f32.mrf.mxu0
        %v1052 = vadd.f32 %v912, %v1051
        %v1053 = vpop.f32.mrf.mxu0
        %v1054 = vpop.f32.mrf.mxu0
        %v1055 = vadd.f32 %v912, %v1054
        %v1056 = vpop.f32.mrf.mxu0
        %1057 = vdwg.mxu0
        %v1058 = vtanh.pop %v996
        %v1059 = vtanh.pop %v999
        %v1060 = vtanh.pop %v1004
        %v1061 = vtanh.pop %v1007
        %v1062 = vtanh.pop %v1012
        %v1063 = vtanh.pop %v1015
        %v1064 = vtanh.pop %v1020
        %v1065 = vtanh.pop %v1023
        %v1066 = vtanh.pop %v1028
        %v1067 = vtanh.pop %v1031
        %v1068 = vtanh.pop %v1036
        %v1069 = vtanh.pop %v1039
        %v1070 = vtanh.pop %v1044
        %v1071 = vtanh.pop %v1047
        %v1072 = vtanh.pop %v1052
        %v1073 = vtanh.pop %v1055
        %v1074 = vld [vmem:[#allocation5 + $0x100] sm:$0xf]
        %v1075 = vld [vmem:[#allocation5 + $0x104] sm:$0xf]
        %v1076 = vld [vmem:[#allocation5 + $0x108] sm:$0xf]
        %v1077 = vld [vmem:[#allocation5 + $0x10c] sm:$0xf]
        %v1078 = vld [vmem:[#allocation5 + $0x110] sm:$0xf]
        %v1079 = vld [vmem:[#allocation5 + $0x114] sm:$0xf]
        %v1080 = vld [vmem:[#allocation5 + $0x118] sm:$0xf]
        %v1081 = vld [vmem:[#allocation5 + $0x11c] sm:$0xf]
        %v1082 = vld [vmem:[#allocation5 + $0x120] sm:$0xf]
        %v1083 = vld [vmem:[#allocation5 + $0x124] sm:$0xf]
        %v1084 = vld [vmem:[#allocation5 + $0x128] sm:$0xf]
        %v1085 = vld [vmem:[#allocation5 + $0x12c] sm:$0xf]
        %v1086 = vld [vmem:[#allocation5 + $0x130] sm:$0xf]
        %v1087 = vld [vmem:[#allocation5 + $0x134] sm:$0xf]
        %v1088 = vld [vmem:[#allocation5 + $0x138] sm:$0xf]
        %v1089 = vld [vmem:[#allocation5 + $0x13c] sm:$0xf]
        %v1090 = vpack.c.bf16 %v1059, %v1058
        %v1091 = vpack.c.bf16 %v1061, %v1060
        %v1092 = vpack.c.bf16 %v1063, %v1062
        %v1093 = vpack.c.bf16 %v1065, %v1064
        %v1094 = vpack.c.bf16 %v1067, %v1066
        %v1095 = vpack.c.bf16 %v1069, %v1068
        %v1096 = vpack.c.bf16 %v1071, %v1070
        %v1097 = vpack.c.bf16 %v1073, %v1072
        %v1098 = vlaneseq
        %v1099 = vshrl.u32 %v1098, 7
        %v1100 = vsub.s32 4, %v1099
        %v1101 = vrot.slane %v277, %v1100
        %v1118 = vunpack.c.l.b16 %v1074
        %v1119 = vunpack.c.l.b16 %v1075
        %v1120 = vunpack.c.l.b16 %v1076
        %v1121 = vunpack.c.l.b16 %v1077
        %v1122 = vunpack.c.l.b16 %v1078
        %v1123 = vunpack.c.l.b16 %v1079
        %v1124 = vunpack.c.l.b16 %v1080
        %v1125 = vunpack.c.l.b16 %v1081
        %v1126 = vunpack.c.l.b16 %v1082
        %v1127 = vunpack.c.l.b16 %v1083
        %v1128 = vunpack.c.l.b16 %v1084
        %v1129 = vunpack.c.l.b16 %v1085
        %v1130 = vunpack.c.l.b16 %v1086
        %v1131 = vunpack.c.l.b16 %v1087
        %v1132 = vunpack.c.l.b16 %v1088
        %v1133 = vunpack.c.l.b16 %v1089
        %v1134 = vpack.c.b16 %v1119, %v1118
        %v1135 = vpack.c.b16 %v1121, %v1120
        %v1136 = vpack.c.b16 %v1123, %v1122
        %v1137 = vpack.c.b16 %v1125, %v1124
        %v1138 = vpack.c.b16 %v1127, %v1126
        %v1139 = vpack.c.b16 %v1129, %v1128
        %v1140 = vpack.c.b16 %v1131, %v1130
        %v1141 = vpack.c.b16 %v1133, %v1132
        %1150 = vmatprep.subr.bf16.mxu0 0
        %1151 = vmatpush1.bf16.msra.mxu0 %v1141
        %1152 = vmatprep.subr.bf16.mxu0 0
        %1153 = vmatpush1.bf16.msra.mxu0 %v1140
        %1154 = vmatprep.subr.bf16.mxu0 0
        %1155 = vmatpush1.bf16.msra.mxu0 %v1139
        %1156 = vmatprep.subr.bf16.mxu0 0
        %1157 = vmatpush1.bf16.msra.mxu0 %v1138
        %1158 = vmatprep.subr.bf16.mxu0 0
        %1159 = vmatpush1.bf16.msra.mxu0 %v1137
        %1160 = vmatprep.subr.bf16.mxu0 0
        %1161 = vmatpush1.bf16.msra.mxu0 %v1136
        %1162 = vmatprep.subr.bf16.mxu0 0
        %1163 = vmatpush1.bf16.msra.mxu0 %v1135
        %1164 = vmatprep.subr.bf16.mxu0 0
        %1165 = vmatpush1.bf16.msra.mxu0 %v1134
        %1166 = vmatprep.subr.bf16.mxu0 0
        %1167 = vmatpush2.bf16.msra.mxu0 0
        %1168 = vmatprep.subr.bf16.mxu0 0
        %1169 = vmatpush2.bf16.msra.mxu0 0
        %1170 = vmatprep.subr.bf16.mxu0 0
        %1171 = vmatpush2.bf16.msra.mxu0 0
        %1172 = vmatprep.subr.bf16.mxu0 0
        %1173 = vmatpush2.bf16.msra.mxu0 0
        %1174 = vmatprep.subr.bf16.mxu0 0
        %1175 = vmatpush2.bf16.msra.mxu0 0
        %1176 = vmatprep.subr.bf16.mxu0 0
        %1177 = vmatpush2.bf16.msra.mxu0 0
        %1178 = vmatprep.subr.bf16.mxu0 0
        %1179 = vmatpush2.bf16.msra.mxu0 0
        %1180 = vmatprep.subr.bf16.mxu0 0
        %1181 = vmatpush2.bf16.msra.mxu0 0
        %1182 = vmatprep.mubr.bf16.mxu0 0
        %1183 = vmatmul.mubr.bf16.gmra.mxu0 %v1090
        %v1184 = vpop.f32.mrf.mxu0
        %v1185 = vadd.f32 %v1101, %v1184
        %v1186 = vpop.f32.mrf.mxu0
        %v1187 = vpop.f32.mrf.mxu0
        %v1188 = vadd.f32 %v1101, %v1187
        %v1189 = vpop.f32.mrf.mxu0
        %1190 = vmatprep.mubr.bf16.mxu0 0
        %1191 = vmatmul.mubr.bf16.gmra.mxu0 %v1091
        %v1192 = vpop.f32.mrf.mxu0
        %v1193 = vadd.f32 %v1101, %v1192
        %v1194 = vpop.f32.mrf.mxu0
        %v1195 = vpop.f32.mrf.mxu0
        %v1196 = vadd.f32 %v1101, %v1195
        %v1197 = vpop.f32.mrf.mxu0
        %1198 = vmatprep.mubr.bf16.mxu0 0
        %1199 = vmatmul.mubr.bf16.gmra.mxu0 %v1092
        %v1200 = vpop.f32.mrf.mxu0
        %v1201 = vadd.f32 %v1101, %v1200
        %v1202 = vpop.f32.mrf.mxu0
        %v1203 = vpop.f32.mrf.mxu0
        %v1204 = vadd.f32 %v1101, %v1203
        %v1205 = vpop.f32.mrf.mxu0
        %1206 = vmatprep.mubr.bf16.mxu0 0
        %1207 = vmatmul.mubr.bf16.gmra.mxu0 %v1093
        %v1208 = vpop.f32.mrf.mxu0
        %v1209 = vadd.f32 %v1101, %v1208
        %v1210 = vpop.f32.mrf.mxu0
        %v1211 = vpop.f32.mrf.mxu0
        %v1212 = vadd.f32 %v1101, %v1211
        %v1213 = vpop.f32.mrf.mxu0
        %1214 = vmatprep.mubr.bf16.mxu0 0
        %1215 = vmatmul.mubr.bf16.gmra.mxu0 %v1094
        %v1216 = vpop.f32.mrf.mxu0
        %v1217 = vadd.f32 %v1101, %v1216
        %v1218 = vpop.f32.mrf.mxu0
        %v1219 = vpop.f32.mrf.mxu0
        %v1220 = vadd.f32 %v1101, %v1219
        %v1221 = vpop.f32.mrf.mxu0
        %1222 = vmatprep.mubr.bf16.mxu0 0
        %1223 = vmatmul.mubr.bf16.gmra.mxu0 %v1095
        %v1224 = vpop.f32.mrf.mxu0
        %v1225 = vadd.f32 %v1101, %v1224
        %v1226 = vpop.f32.mrf.mxu0
        %v1227 = vpop.f32.mrf.mxu0
        %v1228 = vadd.f32 %v1101, %v1227
        %v1229 = vpop.f32.mrf.mxu0
        %1230 = vmatprep.mubr.bf16.mxu0 0
        %1231 = vmatmul.mubr.bf16.gmra.mxu0 %v1096
        %v1232 = vpop.f32.mrf.mxu0
        %v1233 = vadd.f32 %v1101, %v1232
        %v1234 = vpop.f32.mrf.mxu0
        %v1235 = vpop.f32.mrf.mxu0
        %v1236 = vadd.f32 %v1101, %v1235
        %v1237 = vpop.f32.mrf.mxu0
        %1238 = vmatprep.mubr.bf16.mxu0 0
        %1239 = vmatmul.mubr.bf16.gmra.mxu0 %v1097
        %v1240 = vpop.f32.mrf.mxu0
        %v1241 = vadd.f32 %v1101, %v1240
        %v1242 = vpop.f32.mrf.mxu0
        %v1243 = vpop.f32.mrf.mxu0
        %v1244 = vadd.f32 %v1101, %v1243
        %v1245 = vpop.f32.mrf.mxu0
        %1246 = vdwg.mxu0
        %v1247 = vxor.u32 %v1185, 2147483648
        %v1248 = vxor.u32 %v1188, 2147483648
        %v1249 = vxor.u32 %v1193, 2147483648
        %v1250 = vxor.u32 %v1196, 2147483648
        %v1251 = vxor.u32 %v1201, 2147483648
        %v1252 = vxor.u32 %v1204, 2147483648
        %v1253 = vxor.u32 %v1209, 2147483648
        %v1254 = vxor.u32 %v1212, 2147483648
        %v1255 = vxor.u32 %v1217, 2147483648
        %v1256 = vxor.u32 %v1220, 2147483648
        %v1257 = vxor.u32 %v1225, 2147483648
        %v1258 = vxor.u32 %v1228, 2147483648
        %v1259 = vxor.u32 %v1233, 2147483648
        %v1260 = vxor.u32 %v1236, 2147483648
        %v1261 = vxor.u32 %v1241, 2147483648
        %v1262 = vxor.u32 %v1244, 2147483648
        %v1263 = vmul.f32 %v1247, 1.442695
        %v1264 = vpow.pop %v1263
        %v1265 = vmul.f32 %v1248, 1.442695
        %v1266 = vpow.pop %v1265
        %v1267 = vmul.f32 %v1249, 1.442695
        %v1268 = vpow.pop %v1267
        %v1269 = vmul.f32 %v1250, 1.442695
        %v1270 = vpow.pop %v1269
        %v1271 = vmul.f32 %v1251, 1.442695
        %v1272 = vpow.pop %v1271
        %v1273 = vmul.f32 %v1252, 1.442695
        %v1274 = vpow.pop %v1273
        %v1275 = vmul.f32 %v1253, 1.442695
        %v1276 = vpow.pop %v1275
        %v1277 = vmul.f32 %v1254, 1.442695
        %v1278 = vpow.pop %v1277
        %v1279 = vmul.f32 %v1255, 1.442695
        %v1280 = vpow.pop %v1279
        %v1281 = vmul.f32 %v1256, 1.442695
        %v1282 = vpow.pop %v1281
        %v1283 = vmul.f32 %v1257, 1.442695
        %v1284 = vpow.pop %v1283
        %v1285 = vmul.f32 %v1258, 1.442695
        %v1286 = vpow.pop %v1285
        %v1287 = vmul.f32 %v1259, 1.442695
        %v1288 = vpow.pop %v1287
        %v1289 = vmul.f32 %v1260, 1.442695
        %v1290 = vpow.pop %v1289
        %v1291 = vmul.f32 %v1261, 1.442695
        %v1292 = vpow.pop %v1291
        %v1293 = vmul.f32 %v1262, 1.442695
        %v1294 = vpow.pop %v1293
        %v1295 = vadd.f32 %v1264, 1.0
        %v1296 = vadd.f32 %v1266, 1.0
        %v1297 = vadd.f32 %v1268, 1.0
        %v1298 = vadd.f32 %v1270, 1.0
        %v1299 = vadd.f32 %v1272, 1.0
        %v1300 = vadd.f32 %v1274, 1.0
        %v1301 = vadd.f32 %v1276, 1.0
        %v1302 = vadd.f32 %v1278, 1.0
        %v1303 = vadd.f32 %v1280, 1.0
        %v1304 = vadd.f32 %v1282, 1.0
        %v1305 = vadd.f32 %v1284, 1.0
        %v1306 = vadd.f32 %v1286, 1.0
        %v1307 = vadd.f32 %v1288, 1.0
        %v1308 = vadd.f32 %v1290, 1.0
        %v1309 = vadd.f32 %v1292, 1.0
        %v1310 = vadd.f32 %v1294, 1.0
        %v1311 = vrcp.pop %v1295
        %v1312 = vmul.f32 1.0, %v1311
        %v1313 = vrcp.pop %v1296
        %v1314 = vmul.f32 1.0, %v1313
        %v1315 = vrcp.pop %v1297
        %v1316 = vmul.f32 1.0, %v1315
        %v1317 = vrcp.pop %v1298
        %v1318 = vmul.f32 1.0, %v1317
        %v1319 = vrcp.pop %v1299
        %v1320 = vmul.f32 1.0, %v1319
        %v1321 = vrcp.pop %v1300
        %v1322 = vmul.f32 1.0, %v1321
        %v1323 = vrcp.pop %v1301
        %v1324 = vmul.f32 1.0, %v1323
        %v1325 = vrcp.pop %v1302
        %v1326 = vmul.f32 1.0, %v1325
        %v1327 = vrcp.pop %v1303
        %v1328 = vmul.f32 1.0, %v1327
        %v1329 = vrcp.pop %v1304
        %v1330 = vmul.f32 1.0, %v1329
        %v1331 = vrcp.pop %v1305
        %v1332 = vmul.f32 1.0, %v1331
        %v1333 = vrcp.pop %v1306
        %v1334 = vmul.f32 1.0, %v1333
        %v1335 = vrcp.pop %v1307
        %v1336 = vmul.f32 1.0, %v1335
        %v1337 = vrcp.pop %v1308
        %v1338 = vmul.f32 1.0, %v1337
        %v1339 = vrcp.pop %v1309
        %v1340 = vmul.f32 1.0, %v1339
        %v1341 = vrcp.pop %v1310
        %v1342 = vmul.f32 1.0, %v1341
        %1343 = vst [vmem:[%s232] sm:$0xff] %v1312
        %1344 = vst [vmem:[%s232 + $0x8] sm:$0xff] %v1314
        %1345 = vst [vmem:[%s232 + $0x10] sm:$0xff] %v1316
        %1346 = vst [vmem:[%s232 + $0x18] sm:$0xff] %v1318
        %1347 = vst [vmem:[%s232 + $0x20] sm:$0xff] %v1320
        %1348 = vst [vmem:[%s232 + $0x28] sm:$0xff] %v1322
        %1349 = vst [vmem:[%s232 + $0x30] sm:$0xff] %v1324
        %1350 = vst [vmem:[%s232 + $0x38] sm:$0xff] %v1326
        %1351 = vst [vmem:[%s232 + $0x40] sm:$0xff] %v1328
        %1352 = vst [vmem:[%s232 + $0x48] sm:$0xff] %v1330
        %1353 = vst [vmem:[%s232 + $0x50] sm:$0xff] %v1332
        %1354 = vst [vmem:[%s232 + $0x58] sm:$0xff] %v1334
        %1355 = vst [vmem:[%s232 + $0x60] sm:$0xff] %v1336
        %1356 = vst [vmem:[%s232 + $0x68] sm:$0xff] %v1338
        %1357 = vst [vmem:[%s232 + $0x70] sm:$0xff] %v1340
        %1358 = vst [vmem:[%s232 + $0x78] sm:$0xff] %v1342
        %v1359 = vlaneseq
        %v1360 = vand.u32 %v1359, 127
        %vm1361 = vcmp.lt.s32.totalorder %v1360, 64
        %v1362 = vsub.f32 %v1312, %v243
        %v1363 = vsub.f32 %v1314, %v244
        %v1364 = vsub.f32 %v1316, %v245
        %v1365 = vsub.f32 %v1318, %v246
        %v1366 = vsub.f32 %v1320, %v247
        %v1367 = vsub.f32 %v1322, %v248
        %v1368 = vsub.f32 %v1324, %v249
        %v1369 = vsub.f32 %v1326, %v250
        %v1370 = vsub.f32 %v1328, %v251
        %v1371 = vsub.f32 %v1330, %v252
        %v1372 = vsub.f32 %v1332, %v253
        %v1373 = vsub.f32 %v1334, %v254
        %v1374 = vsub.f32 %v1336, %v255
        %v1375 = vsub.f32 %v1338, %v256
        %v1376 = vsub.f32 %v1340, %v257
        %v1377 = vsub.f32 %v1342, %v258
        %v1378 = vsel %vm1361, %v1362, 0.0
        %v1379 = vsel %vm1361, %v1363, 0.0
        %v1380 = vsel %vm1361, %v1364, 0.0
        %v1381 = vsel %vm1361, %v1365, 0.0
        %v1382 = vsel %vm1361, %v1366, 0.0
        %v1383 = vsel %vm1361, %v1367, 0.0
        %v1384 = vsel %vm1361, %v1368, 0.0
        %v1385 = vsel %vm1361, %v1369, 0.0
        %v1386 = vsel %vm1361, %v1370, 0.0
        %v1387 = vsel %vm1361, %v1371, 0.0
        %v1388 = vsel %vm1361, %v1372, 0.0
        %v1389 = vsel %vm1361, %v1373, 0.0
        %v1390 = vsel %vm1361, %v1374, 0.0
        %v1391 = vsel %vm1361, %v1375, 0.0
        %v1392 = vsel %vm1361, %v1376, 0.0
        %v1393 = vsel %vm1361, %v1377, 0.0
        %v1394 = vmul.f32 %v1378, %v1378
        %v1395 = vmul.f32 %v1379, %v1379
        %v1396 = vmul.f32 %v1380, %v1380
        %v1397 = vmul.f32 %v1381, %v1381
        %v1398 = vmul.f32 %v1382, %v1382
        %v1399 = vmul.f32 %v1383, %v1383
        %v1400 = vmul.f32 %v1384, %v1384
        %v1401 = vmul.f32 %v1385, %v1385
        %v1402 = vmul.f32 %v1386, %v1386
        %v1403 = vmul.f32 %v1387, %v1387
        %v1404 = vmul.f32 %v1388, %v1388
        %v1405 = vmul.f32 %v1389, %v1389
        %v1406 = vmul.f32 %v1390, %v1390
        %v1407 = vmul.f32 %v1391, %v1391
        %v1408 = vmul.f32 %v1392, %v1392
        %v1409 = vmul.f32 %v1393, %v1393
        %v1410 = vadd.f32 %v1394, %v1395
        %v1411 = vadd.f32 %v1410, %v1396
        %v1412 = vadd.f32 %v1411, %v1397
        %v1413 = vadd.f32 %v1412, %v1398
        %v1414 = vadd.f32 %v1413, %v1399
        %v1415 = vadd.f32 %v1414, %v1400
        %v1416 = vadd.f32 %v1415, %v1401
        %v1417 = vadd.f32 %v1416, %v1402
        %v1418 = vadd.f32 %v1417, %v1403
        %v1419 = vadd.f32 %v1418, %v1404
        %v1420 = vadd.f32 %v1419, %v1405
        %v1421 = vadd.f32 %v1420, %v1406
        %v1422 = vadd.f32 %v1421, %v1407
        %v1423 = vadd.f32 %v1422, %v1408
        %v1424 = vadd.f32 %v1423, %v1409
        %v1425 = vrot.slane %v1424, 4
        %v1426 = vadd.f32 %v1424, %v1425
        %v1427 = vrot.slane %v1426, 2
        %v1428 = vadd.f32 %v1426, %v1427
        %v1429 = vrot.slane %v1428, 1
        %v1430 = vadd.f32 %v1428, %v1429
        %1431 = vst [vmem:[%s239] sm:$0x1] %v1430
        %v1432 = vadd.f32 %v743, 1.0
        %v1433 = vadd.f32 %v746, 1.0
        %v1434 = vadd.f32 %v751, 1.0
        %v1435 = vadd.f32 %v754, 1.0
        %v1436 = vadd.f32 %v759, 1.0
        %v1437 = vadd.f32 %v762, 1.0
        %v1438 = vadd.f32 %v767, 1.0
        %v1439 = vadd.f32 %v770, 1.0
        %v1440 = vadd.f32 %v775, 1.0
        %v1441 = vadd.f32 %v778, 1.0
        %v1442 = vadd.f32 %v783, 1.0
        %v1443 = vadd.f32 %v786, 1.0
        %v1444 = vadd.f32 %v791, 1.0
        %v1445 = vadd.f32 %v794, 1.0
        %v1446 = vadd.f32 %v799, 1.0
        %v1447 = vadd.f32 %v802, 1.0
        %v1448 = vmul.f32 %v578, %v578
        %v1449 = vmul.f32 %v581, %v581
        %v1450 = vmul.f32 %v586, %v586
        %v1451 = vmul.f32 %v589, %v589
        %v1452 = vmul.f32 %v594, %v594
        %v1453 = vmul.f32 %v597, %v597
        %v1454 = vmul.f32 %v602, %v602
        %v1455 = vmul.f32 %v605, %v605
        %v1456 = vmul.f32 %v610, %v610
        %v1457 = vmul.f32 %v613, %v613
        %v1458 = vmul.f32 %v618, %v618
        %v1459 = vmul.f32 %v621, %v621
        %v1460 = vmul.f32 %v626, %v626
        %v1461 = vmul.f32 %v629, %v629
        %v1462 = vmul.f32 %v634, %v634
        %v1463 = vmul.f32 %v637, %v637
        %v1464 = vsub.f32 %v1432, %v1448
        %v1465 = vsub.f32 %v1433, %v1449
        %v1466 = vsub.f32 %v1434, %v1450
        %v1467 = vsub.f32 %v1435, %v1451
        %v1468 = vsub.f32 %v1436, %v1452
        %v1469 = vsub.f32 %v1437, %v1453
        %v1470 = vsub.f32 %v1438, %v1454
        %v1471 = vsub.f32 %v1439, %v1455
        %v1472 = vsub.f32 %v1440, %v1456
        %v1473 = vsub.f32 %v1441, %v1457
        %v1474 = vsub.f32 %v1442, %v1458
        %v1475 = vsub.f32 %v1443, %v1459
        %v1476 = vsub.f32 %v1444, %v1460
        %v1477 = vsub.f32 %v1445, %v1461
        %v1478 = vsub.f32 %v1446, %v1462
        %v1479 = vsub.f32 %v1447, %v1463
        %v1480 = vmul.f32 %v822, %v822
        %v1481 = vmul.f32 %v824, %v824
        %v1482 = vmul.f32 %v826, %v826
        %v1483 = vmul.f32 %v828, %v828
        %v1484 = vmul.f32 %v830, %v830
        %v1485 = vmul.f32 %v832, %v832
        %v1486 = vmul.f32 %v834, %v834
        %v1487 = vmul.f32 %v836, %v836
        %v1488 = vmul.f32 %v838, %v838
        %v1489 = vmul.f32 %v840, %v840
        %v1490 = vmul.f32 %v842, %v842
        %v1491 = vmul.f32 %v844, %v844
        %v1492 = vmul.f32 %v846, %v846
        %v1493 = vmul.f32 %v848, %v848
        %v1494 = vmul.f32 %v850, %v850
        %v1495 = vmul.f32 %v852, %v852
        %v1496 = vsub.f32 %v1464, %v1480
        %v1497 = vsub.f32 %v1465, %v1481
        %v1498 = vsub.f32 %v1466, %v1482
        %v1499 = vsub.f32 %v1467, %v1483
        %v1500 = vsub.f32 %v1468, %v1484
        %v1501 = vsub.f32 %v1469, %v1485
        %v1502 = vsub.f32 %v1470, %v1486
        %v1503 = vsub.f32 %v1471, %v1487
        %v1504 = vsub.f32 %v1472, %v1488
        %v1505 = vsub.f32 %v1473, %v1489
        %v1506 = vsub.f32 %v1474, %v1490
        %v1507 = vsub.f32 %v1475, %v1491
        %v1508 = vsub.f32 %v1476, %v1492
        %v1509 = vsub.f32 %v1477, %v1493
        %v1510 = vsub.f32 %v1478, %v1494
        %v1511 = vsub.f32 %v1479, %v1495
        %v1512 = vadd.f32 %v1496, %v1497
        %v1513 = vadd.f32 %v1512, %v1498
        %v1514 = vadd.f32 %v1513, %v1499
        %v1515 = vadd.f32 %v1514, %v1500
        %v1516 = vadd.f32 %v1515, %v1501
        %v1517 = vadd.f32 %v1516, %v1502
        %v1518 = vadd.f32 %v1517, %v1503
        %v1519 = vadd.f32 %v1518, %v1504
        %v1520 = vadd.f32 %v1519, %v1505
        %v1521 = vadd.f32 %v1520, %v1506
        %v1522 = vadd.f32 %v1521, %v1507
        %v1523 = vadd.f32 %v1522, %v1508
        %v1524 = vadd.f32 %v1523, %v1509
        %v1525 = vadd.f32 %v1524, %v1510
        %v1526 = vadd.f32 %v1525, %v1511
        %v1527 = vrot.slane %v1526, 4
        %v1528 = vadd.f32 %v1526, %v1527
        %v1529 = vrot.slane %v1528, 2
        %v1530 = vadd.f32 %v1528, %v1529
        %v1531 = vrot.slane %v1530, 1
        %v1532 = vadd.f32 %v1530, %v1531
        %1533 = vst [vmem:[%s239 + $0x1] sm:$0x1] %v1532
        %s1534 = sand.u32 %s80, 1
        %s1535 = scalar_lea.sflag [#allocation4], %s1534
        %s1536 = sand.u32 %s80, 1
        %s1537 = smul.addr %s1536, 128
        %s1538 = scalar_lea.vmem [#allocation7], %s1537
        %s1539 = sand.u32 %s106, 1
        %s1540 = scalar_lea.sflag [#allocation9], %s1539
        %s1541 = sand.u32 %s106, 1
        %s1542 = smul.addr %s1541, 2
        %s1543 = scalar_lea.vmem [#allocation8], %s1542
        // Predicated region
        $region37: #{tpu_custom_call.1} parent=27 // pred_check
          %p1544 = pneg %p90
        $region38: #{tpu_custom_call.1} parent=27 // pred_check_branch
          %1546 = sbr.rel (%p1544) target = $region40
        $region39: #{tpu_custom_call.1} parent=27 // pred_region
          %s1547 = smul.u32 16, %s25
          %s1549 = ssub.s32 2048, 2048
          %1550 = vsyncadd %s1535, %s1549
          %s1551 = smul.addr %s1547, 128
          %s1552 = scalar_lea.hbm %s2, %s1551
          %s1553 = sshll.u32 %s1538, 4
          %s1554 = int_to_ptr.vmem [resolvable:$true] %s1553
          %1559 = dma.vmem_to_hbm [thread:$0]  %s1554, 2048, %s1552, %s1535, 128, 128, 8
        $region40: #{tpu_custom_call.1} parent=27 // pred_fallthru
          _
        // Predicated region
        $region41: #{tpu_custom_call.1} parent=27 // pred_check
          %p1560 = pneg %p116
        $region42: #{tpu_custom_call.1} parent=27 // pred_check_branch
          %1562 = sbr.rel (%p1560) target = $region44
        $region43: #{tpu_custom_call.1} parent=27 // pred_region
          %s1564 = ssub.s32 32, 32
          %1565 = vsyncadd %s1540, %s1564
          %s1566 = smul.addr %s25, 32
          %s1567 = scalar_lea.hbm %s3, %s1566
          %s1569 = sshll.u32 %s1543, 4
          %s1570 = int_to_ptr.vmem [resolvable:$true] %s1569
          %1572 = dma.vmem_to_hbm [thread:$0]  %s1570, 32, %s1567, %s1540
        $region44: #{tpu_custom_call.1} parent=27 // pred_fallthru
          _
      $region28: #{tpu_custom_call.1} parent=5 // pred_fallthru
        _
      %p1573 = scmp.le.s32.totalorder 2, %s20
      // Predicated region
      $region45: #{tpu_custom_call.1} parent=5 // pred_check
        %p1574 = pneg %p1573
      $region46: #{tpu_custom_call.1} parent=5 // pred_check_branch
        %1576 = sbr.rel (%p1574) target = $region48
      $region47: #{tpu_custom_call.1} parent=5 // pred_region
        %s1577 = ssub.s32 %s20, 2
        // Predicated region
        $region49: #{tpu_custom_call.1} parent=47 // pred_check
          %p1578 = pneg %p96
        $region50: #{tpu_custom_call.1} parent=47 // pred_check_branch
          %1580 = sbr.rel (%p1578) target = $region52
        $region51: #{tpu_custom_call.1} parent=47 // pred_region
          %s1581 = sand.u32 %s81, 1
          %s1582 = scalar_lea.sflag [#allocation4], %s1581
          %s1583 = sand.u32 %s81, 1
          %s1584 = smul.addr %s1583, 128
          %s1585 = scalar_lea.vmem [#allocation7], %s1584
          %1586 = dma.done %s1582, 2048
        $region52: #{tpu_custom_call.1} parent=47 // pred_fallthru
          _
        // Predicated region
        $region53: #{tpu_custom_call.1} parent=47 // pred_check
          %p1587 = pneg %p122
        $region54: #{tpu_custom_call.1} parent=47 // pred_check_branch
          %1589 = sbr.rel (%p1587) target = $region56
        $region55: #{tpu_custom_call.1} parent=47 // pred_region
          %s1590 = sand.u32 %s107, 1
          %s1591 = scalar_lea.sflag [#allocation9], %s1590
          %s1592 = sand.u32 %s107, 1
          %s1593 = smul.addr %s1592, 2
          %s1594 = scalar_lea.vmem [#allocation8], %s1593
          %1595 = dma.done %s1591, 32
        $region56: #{tpu_custom_call.1} parent=47 // pred_fallthru
          _
      $region48: #{tpu_custom_call.1} parent=5 // pred_fallthru
        _
    $region6: #{tpu_custom_call.1} parent=1 // loop_footer
      %s24 = sadd.s32 1, %s20
    $region7: #{tpu_custom_call.1} parent=1 // loop_footer_branch
      %19 = sbr.rel target = $region3
    $region8: #{tpu_custom_call.1} parent=1 // loop_exit
      _
    %1596 = vsyncpa [#allocation3], 1
    %s1597 = scalar_lea.sflag [#allocation3], 1
    %1598 = vsyncpa %s1597, 1
    %1599 = vsyncpa [#allocation6], 1
    %1600 = vsyncpa [#allocation4], 1
    %s1601 = scalar_lea.sflag [#allocation4], 1
    %1602 = vsyncpa %s1601, 1
    %1603 = vsyncpa [#allocation9], 1
    %s1604 = scalar_lea.sflag [#allocation9], 1
    %1605 = vsyncpa %s1604, 1

</llo_original>
